<compile_context>
chip_gen: v6e
topology: v6e:2x2x1
jax: 0.10.0
libtpu: 0.0.40
codegen_flags: <defaults>
</compile_context>

<pallas_src>
import math

import jax
import jax.numpy as jnp
from jax.experimental import pallas as pl
from jax.experimental.pallas import tpu as pltpu


# ----------------------------------------------------------------------------
# Fused kernel: fused QKV matmul -> per-head attention -> head concat (VMEM
# scratch) -> output projection -> FFN (linear1 -> BN(train) -> tanh -> linear2)
# -> residual.
# ----------------------------------------------------------------------------
def encoder_layer_kernel(x_ref, mask_ref,
                         wqkv_ref, bqkv_ref, wo_ref, bo_ref,
                         w1_ref, b1_ref, gamma_ref, beta_ref, w2_ref, b2_ref,
                         out_ref, attnw_ref, ctx_ref):
    B, S, D = x_ref.shape
    H = attnw_ref.shape[1]
    d_k = D // H
    N = B * S

    # ---- fused QKV projection: single (N, D) @ (D, 3D) matmul (scale folded
    #      into the Q columns on the host).
    x2d = x_ref[...].reshape(N, D)
    qkv = jnp.dot(x2d, wqkv_ref[...],
                  preferred_element_type=jnp.float32) + bqkv_ref[...]   # (N, 3D)
    qkv = qkv.reshape(B, S, 3 * D)

    # mask (B, 1, S) key-padding mask or full (B, S, S); nonzero == masked.
    # Hoisted broadcast + compare (reused by every head).
    neg_mask = jnp.broadcast_to(mask_ref[...], (B, S, S)) > 0.0

    # ---- per-head scaled dot-product attention.
    w_heads = []
    for h in range(H):
        q_h = qkv[:, :, h * d_k:(h + 1) * d_k]                   # (B, S, d_k)
        k_h = qkv[:, :, D + h * d_k:D + (h + 1) * d_k]
        v_h = qkv[:, :, 2 * D + h * d_k:2 * D + (h + 1) * d_k]

        scores = jnp.einsum('bqk,btk->bqt', q_h, k_h,
                            preferred_element_type=jnp.float32)  # (B, S, S)
        scores = jnp.where(neg_mask, jnp.float32(-1e9), scores)  # masked_fill_

        m = jnp.max(scores, axis=-1, keepdims=True)
        e = jnp.exp(scores - m)
        w_h = e / jnp.sum(e, axis=-1, keepdims=True)             # exact softmax
        w_heads.append(w_h)

        ctx_h = jnp.einsum('bqt,btk->bqk', w_h, v_h,
                           preferred_element_type=jnp.float32)   # (B, S, d_k)
        # Concatenate heads along the lane dim via a tiny VMEM scratch so the
        # output projection contracts over D (not d_k) in a single matmul.
        ctx_ref[:, h * d_k:(h + 1) * d_k] = ctx_h.reshape(N, d_k)

    attnw_ref[...] = jnp.stack(w_heads, axis=1)                  # one (B,H,S,S) store

    # ---- output projection: single (N, D) @ (D, D) matmul.
    attn_out = jnp.dot(ctx_ref[...], wo_ref[...],
                       preferred_element_type=jnp.float32) + bo_ref[...]  # (N, D)

    # ---- FFN: linear1 -> BatchNorm1d (training-mode batch stats) -> tanh -> linear2
    h1 = jnp.dot(attn_out, w1_ref[...],
                 preferred_element_type=jnp.float32) + b1_ref[...]        # (N, d_ff)
    inv_n = jnp.float32(1.0 / N)
    s1 = jnp.sum(h1, axis=0, keepdims=True)                      # one-pass stats
    s2 = jnp.sum(h1 * h1, axis=0, keepdims=True)
    mean = s1 * inv_n
    var = jnp.maximum(s2 * inv_n - mean * mean, 0.0)             # biased variance
    h1 = (h1 - mean) * jax.lax.rsqrt(var + 1e-5)
    h1 = h1 * gamma_ref[...] + beta_ref[...]
    h1 = jnp.tanh(h1)
    ffn = jnp.dot(h1, w2_ref[...],
                  preferred_element_type=jnp.float32) + b2_ref[...]       # (N, D)

    out_ref[...] = attn_out + ffn                                # residual


# ----------------------------------------------------------------------------
# Wrapper: host-side weight repacking + single fused pallas_call
# ----------------------------------------------------------------------------
def encoder_layer(x, attn_mask, params, *, n_heads):
    B, S, D = x.shape
    H = n_heads
    d_k = D // H
    d_ff = params["w1"].shape[0]
    N = B * S
    scale = 1.0 / math.sqrt(d_k)

    # nn.Linear stores (out, in); repack once on the host to (in, out), fuse
    # Q/K/V into one (D, 3D) weight and fold 1/sqrt(d_k) into the Q part.
    wqkv = jnp.concatenate([params["wq"].T * scale,
                            params["wk"].T,
                            params["wv"].T], axis=1)                       # (D, 3D)
    bqkv = jnp.concatenate([params["bq"] * scale,
                            params["bk"],
                            params["bv"]], axis=1)                         # (1, 3D)
    wo_t = params["wo"].T                                                  # (D, D)
    w1t = params["w1"].T                                                   # (D, d_ff)
    w2t = params["w2"].T                                                   # (d_ff, D)

    # Mask: accept a (B,1,S) key-padding mask or a full (B,S,S) mask,
    # nonzero == masked; pass as f32 so the kernel does a single compare.
    mask_f = attn_mask.astype(jnp.float32)
    if mask_f.ndim == 2:
        mask_f = mask_f[:, None, :]

    inputs = (x, mask_f, wqkv, bqkv, wo_t, params["bo"],
              w1t, params["b1"], params["gamma"], params["beta"],
              w2t, params["b2"])

    def full_spec(a):
        zeros = (0,) * a.ndim
        return pl.BlockSpec(a.shape, lambda i: zeros)

    flops = (2 * N * D * 3 * D            # fused QKV projection
             + 2 * B * H * S * S * d_k    # scores
             + 2 * B * H * S * S * d_k    # context
             + 2 * N * D * D              # output projection
             + 2 * N * D * d_ff           # linear1
             + 2 * N * d_ff * D)          # linear2
    transcendentals = B * H * S * S + N * d_ff + d_ff
    bytes_accessed = (sum(int(a.size) * a.dtype.itemsize for a in inputs)
                      + N * D * 4 + B * H * S * S * 4)

    # Single launch, single grid step: at these sizes everything (including the
    # global BatchNorm reduction over all B*S rows) fits easily in VMEM.
    out_flat, attn_w = pl.pallas_call(
        encoder_layer_kernel,
        out_shape=(
            jax.ShapeDtypeStruct((N, D), jnp.float32),
            jax.ShapeDtypeStruct((B, H, S, S), jnp.float32),
        ),
        grid=(1,),
        in_specs=[full_spec(a) for a in inputs],
        out_specs=(
            pl.BlockSpec((N, D), lambda i: (0, 0)),
            pl.BlockSpec((B, H, S, S), lambda i: (0, 0, 0, 0)),
        ),
        scratch_shapes=[pltpu.VMEM((N, D), jnp.float32)],
        compiler_params=pltpu.CompilerParams(
            dimension_semantics=("arbitrary",),
            vmem_limit_bytes=32 * 1024 * 1024),
        cost_estimate=pl.CostEstimate(
            flops=flops, transcendentals=transcendentals,
            bytes_accessed=bytes_accessed),
    )(*inputs)

    return out_flat, attn_w


# ----------------------------------------------------------------------------
# Pure-JAX reference (direct port of the PyTorch forward) for validation.
# ----------------------------------------------------------------------------
def ref_encoder_layer(x, attn_mask, params, n_heads):
    B, S, D = x.shape
    H = n_heads
    d_k = D // H
    hi = jax.lax.Precision.HIGHEST

    def lin(t, w, b):
        return jnp.einsum('...i,oi->...o', t, w, precision=hi) + b

    def heads(t):
        return t.reshape(B, S, H, d_k).transpose(0, 2, 1, 3)      # (B,H,S,dk)

    q = heads(lin(x, params["wq"], params["bq"]))
    k = heads(lin(x, params["wk"], params["bk"]))
    v = heads(lin(x, params["wv"], params["bv"]))

    scores = jnp.einsum('bhqd,bhtd->bhqt', q, k, precision=hi) / math.sqrt(d_k)
    mask = attn_mask.astype(jnp.float32)
    if mask.ndim == 2:
        mask = mask[:, None, :]
    scores = jnp.where((mask > 0)[:, None, :, :], jnp.float32(-1e9), scores)
    attn_w = jax.nn.softmax(scores, axis=-1)

    ctx = jnp.einsum('bhqt,bhtd->bhqd', attn_w, v, precision=hi)
    ctx = ctx.transpose(0, 2, 1, 3).reshape(B * S, D)
    attn_out = lin(ctx, params["wo"], params["bo"])

    h1 = lin(attn_out, params["w1"], params["b1"])
    mean = jnp.mean(h1, axis=0, keepdims=True)
    var = jnp.mean((h1 - mean) ** 2, axis=0, keepdims=True)
    h1 = (h1 - mean) / jnp.sqrt(var + 1e-5)
    h1 = h1 * params["gamma"] + params["beta"]
    h1 = jnp.tanh(h1)
    ffn = lin(h1, params["w2"], params["b2"])
    return attn_out + ffn, attn_w


def init_params(key, d_model, n_heads, d_ff):
    D = d_model * 2
    ks = jax.random.split(key, 12)
    scale = 0.05

    def lin(kw, kb, out_f, in_f):
        w = scale * jax.random.normal(kw, (out_f, in_f), jnp.float32)
        b = scale * jax.random.normal(kb, (1, out_f), jnp.float32)
        return w, b

    wq, bq = lin(ks[0], ks[1], D, D)
    wk, bk = lin(ks[2], ks[3], D, D)
    wv, bv = lin(ks[4], ks[5], D, D)
    wo, bo = lin(ks[6], ks[7], D, D)
    w1, b1 = lin(ks[8], ks[9], d_ff, D)
    w2, b2 = lin(ks[10], ks[11], D, d_ff)
    gamma = jnp.ones((1, d_ff), jnp.float32)   # BatchNorm1d init
    beta = jnp.zeros((1, d_ff), jnp.float32)
    return dict(wq=wq, bq=bq, wk=wk, bk=bk, wv=wv, bv=bv, wo=wo, bo=bo,
                w1=w1, b1=b1, w2=w2, b2=b2, gamma=gamma, beta=beta)


if __name__ == "__main__":
    d_model, n_heads, d_ff = 16, 4, 64
    B, S = 2, 8
    D = d_model * 2

    key = jax.random.PRNGKey(0)
    kp, kx = jax.random.split(key)
    params = init_params(kp, d_model, n_heads, d_ff)

    x = jax.random.normal(kx, (B, S, D), jnp.float32)

    # padding-style attention mask in the compact (B, 1, S) key-mask form
    # (nonzero == masked): batch 0 full length, batch 1 masks last 2 keys.
    lengths = jnp.array([S, S - 2], jnp.int32)
    key_idx = jnp.arange(S, dtype=jnp.int32)
    attn_mask = (key_idx[None, :] >= lengths[:, None]).astype(jnp.float32)[:, None, :]

    out, attn_w = encoder_layer(x, attn_mask, params, n_heads=n_heads)
    jax.block_until_ready((out, attn_w))

    assert out.shape == (B * S, D)
    assert attn_w.shape == (B, n_heads, S, S)
    assert bool(jnp.all(jnp.isfinite(out))) and bool(jnp.all(jnp.isfinite(attn_w)))

    # correctness check against a pure-JAX port of the PyTorch forward
    out_ref, attn_w_ref = ref_encoder_layer(x, attn_mask, params, n_heads)
    assert bool(jnp.allclose(out, out_ref, rtol=1e-2, atol=1e-2))
    assert bool(jnp.allclose(attn_w, attn_w_ref, rtol=1e-2, atol=1e-2))

    print("KERNEL_OK")
</pallas_src>

<mosaic_0001>
module attributes {stable_mosaic.version = 11 : i64} {
  func.func @encoder_layer_kernel(%arg0: i32, %arg1: memref<2x8x32xf32, #tpu.memory_space<vmem>>, %arg2: memref<2x1x8xf32, #tpu.memory_space<vmem>>, %arg3: memref<32x96xf32, #tpu.memory_space<vmem>>, %arg4: memref<1x96xf32, #tpu.memory_space<vmem>>, %arg5: memref<32x32xf32, #tpu.memory_space<vmem>>, %arg6: memref<1x32xf32, #tpu.memory_space<vmem>>, %arg7: memref<32x64xf32, #tpu.memory_space<vmem>>, %arg8: memref<1x64xf32, #tpu.memory_space<vmem>>, %arg9: memref<1x64xf32, #tpu.memory_space<vmem>>, %arg10: memref<1x64xf32, #tpu.memory_space<vmem>>, %arg11: memref<64x32xf32, #tpu.memory_space<vmem>>, %arg12: memref<1x32xf32, #tpu.memory_space<vmem>>, %arg13: memref<16x32xf32, #tpu.memory_space<vmem>>, %arg14: memref<2x4x8x8xf32, #tpu.memory_space<vmem>>, %arg15: memref<16x32xf32, #tpu.memory_space<vmem>>) attributes {dimension_semantics = [#tpu.dimension_semantics<arbitrary>], iteration_bounds = array<i64: 1>, scalar_prefetch = 0 : i64, scratch_operands = 1 : i64, tpu.core_type = #tpu.core_type<tc>, window_params = [{pipeline_mode = #tpu.pipeline_mode<synchronous>, transform_indices = @transform_0, window_bounds = array<i64: 2, 8, 32>}, {pipeline_mode = #tpu.pipeline_mode<synchronous>, transform_indices = @transform_1, window_bounds = array<i64: 2, 1, 8>}, {pipeline_mode = #tpu.pipeline_mode<synchronous>, transform_indices = @transform_2, window_bounds = array<i64: 32, 96>}, {pipeline_mode = #tpu.pipeline_mode<synchronous>, transform_indices = @transform_3, window_bounds = array<i64: 1, 96>}, {pipeline_mode = #tpu.pipeline_mode<synchronous>, transform_indices = @transform_4, window_bounds = array<i64: 32, 32>}, {pipeline_mode = #tpu.pipeline_mode<synchronous>, transform_indices = @transform_5, window_bounds = array<i64: 1, 32>}, {pipeline_mode = #tpu.pipeline_mode<synchronous>, transform_indices = @transform_6, window_bounds = array<i64: 32, 64>}, {pipeline_mode = #tpu.pipeline_mode<synchronous>, transform_indices = @transform_7, window_bounds = array<i64: 1, 64>}, {pipeline_mode = #tpu.pipeline_mode<synchronous>, transform_indices = @transform_8, window_bounds = array<i64: 1, 64>}, {pipeline_mode = #tpu.pipeline_mode<synchronous>, transform_indices = @transform_9, window_bounds = array<i64: 1, 64>}, {pipeline_mode = #tpu.pipeline_mode<synchronous>, transform_indices = @transform_10, window_bounds = array<i64: 64, 32>}, {pipeline_mode = #tpu.pipeline_mode<synchronous>, transform_indices = @transform_11, window_bounds = array<i64: 1, 32>}, {pipeline_mode = #tpu.pipeline_mode<synchronous>, transform_indices = @transform_12, window_bounds = array<i64: 16, 32>}, {pipeline_mode = #tpu.pipeline_mode<synchronous>, transform_indices = @transform_13, window_bounds = array<i64: 2, 4, 8, 8>}]} {
    %c0 = arith.constant 0 : index
    %c0_0 = arith.constant 0 : index
    %c0_1 = arith.constant 0 : index
    %0 = vector.load %arg1[%c0, %c0_0, %c0_1] : memref<2x8x32xf32, #tpu.memory_space<vmem>>, vector<2x8x32xf32>
    %1 = vector.shape_cast %0 : vector<2x8x32xf32> to vector<16x32xf32>
    %c0_2 = arith.constant 0 : index
    %c0_3 = arith.constant 0 : index
    %2 = vector.load %arg3[%c0_2, %c0_3] : memref<32x96xf32, #tpu.memory_space<vmem>>, vector<32x96xf32>
    %cst = arith.constant dense<0.000000e+00> : vector<16x96xf32>
    %3 = tpu.matmul %1, %2, %cst {dimension_numbers = #tpu.dot_dimension_numbers<[1], [0], [0], [1], [0, 0, 1, 1], [], []>} : vector<16x32xf32>, vector<32x96xf32>, vector<16x96xf32> -> vector<16x96xf32>
    %c0_4 = arith.constant 0 : index
    %c0_5 = arith.constant 0 : index
    %4 = vector.load %arg4[%c0_4, %c0_5] : memref<1x96xf32, #tpu.memory_space<vmem>>, vector<1x96xf32>
    %5 = vector.broadcast %4 : vector<1x96xf32> to vector<16x96xf32>
    %6 = arith.addf %3, %5 : vector<16x96xf32>
    %7 = vector.shape_cast %6 : vector<16x96xf32> to vector<2x8x96xf32>
    %c0_6 = arith.constant 0 : index
    %c0_7 = arith.constant 0 : index
    %c0_8 = arith.constant 0 : index
    %8 = vector.load %arg2[%c0_6, %c0_7, %c0_8] : memref<2x1x8xf32, #tpu.memory_space<vmem>>, vector<2x1x8xf32>
    %9 = vector.shape_cast %8 : vector<2x1x8xf32> to vector<2x1x8xf32>
    %10 = vector.broadcast %9 : vector<2x1x8xf32> to vector<2x8x8xf32>
    %cst_9 = arith.constant 0.000000e+00 : f32
    %11 = vector.broadcast %cst_9 : f32 to vector<2x8x8xf32>
    %12 = arith.cmpf ogt, %10, %11 : vector<2x8x8xf32>
    %13 = vector.extract_strided_slice %7 {offsets = [0, 0, 0], sizes = [2, 8, 8], strides = [1, 1, 1]} : vector<2x8x96xf32> to vector<2x8x8xf32>
    %14 = vector.extract_strided_slice %7 {offsets = [0, 0, 32], sizes = [2, 8, 8], strides = [1, 1, 1]} : vector<2x8x96xf32> to vector<2x8x8xf32>
    %15 = vector.extract_strided_slice %7 {offsets = [0, 0, 64], sizes = [2, 8, 8], strides = [1, 1, 1]} : vector<2x8x96xf32> to vector<2x8x8xf32>
    "tpu.trace_start"() <{level = 10 : i32, message = "bqk,btk->bqt"}> : () -> ()
    %cst_10 = arith.constant dense<0.000000e+00> : vector<2x8x8xf32>
    %16 = tpu.matmul %13, %14, %cst_10 {dimension_numbers = #tpu.dot_dimension_numbers<[2], [2], [1], [1], [0, 0, 0, 1, 1, 1], [0], [0]>} : vector<2x8x8xf32>, vector<2x8x8xf32>, vector<2x8x8xf32> -> vector<2x8x8xf32>
    %cst_11 = arith.constant -1.000000e+09 : f32
    "tpu.trace_stop"() : () -> ()
    %17 = vector.broadcast %cst_11 : f32 to vector<2x8x8xf32>
    %18 = arith.select %12, %17, %16 : vector<2x8x8xi1>, vector<2x8x8xf32>
    %cst_12 = arith.constant dense<0xFF800000> : vector<2x8xf32>
    %19 = vector.multi_reduction <maximumf>, %18, %cst_12 [2] : vector<2x8x8xf32> to vector<2x8xf32>
    %20 = vector.shape_cast %19 : vector<2x8xf32> to vector<2x8x1xf32>
    %21 = vector.broadcast %20 : vector<2x8x1xf32> to vector<2x8x8xf32>
    %22 = arith.subf %18, %21 : vector<2x8x8xf32>
    %23 = math.exp %22 : vector<2x8x8xf32>
    %cst_13 = arith.constant dense<0.000000e+00> : vector<2x8xf32>
    %24 = vector.multi_reduction <add>, %23, %cst_13 [2] : vector<2x8x8xf32> to vector<2x8xf32>
    %25 = vector.shape_cast %24 : vector<2x8xf32> to vector<2x8x1xf32>
    %26 = vector.broadcast %25 : vector<2x8x1xf32> to vector<2x8x8xf32>
    %27 = arith.divf %23, %26 : vector<2x8x8xf32>
    "tpu.trace_start"() <{level = 10 : i32, message = "bqt,btk->bqk"}> : () -> ()
    %cst_14 = arith.constant dense<0.000000e+00> : vector<2x8x8xf32>
    %28 = tpu.matmul %27, %15, %cst_14 {dimension_numbers = #tpu.dot_dimension_numbers<[2], [1], [1], [2], [0, 0, 0, 1, 1, 2], [0], [0]>} : vector<2x8x8xf32>, vector<2x8x8xf32>, vector<2x8x8xf32> -> vector<2x8x8xf32>
    "tpu.trace_stop"() : () -> ()
    %29 = vector.shape_cast %28 : vector<2x8x8xf32> to vector<16x8xf32>
    %c0_15 = arith.constant 0 : index
    %c0_16 = arith.constant 0 : index
    %30 = vector.load %arg15[%c0_15, %c0_16] : memref<16x32xf32, #tpu.memory_space<vmem>>, vector<16x8xf32>
    tpu.vector_store %arg15[%c0_15, %c0_16], %29 {strides = array<i32>} : memref<16x32xf32, #tpu.memory_space<vmem>>, vector<16x8xf32>,
    %31 = vector.extract_strided_slice %7 {offsets = [0, 0, 8], sizes = [2, 8, 8], strides = [1, 1, 1]} : vector<2x8x96xf32> to vector<2x8x8xf32>
    %32 = vector.extract_strided_slice %7 {offsets = [0, 0, 40], sizes = [2, 8, 8], strides = [1, 1, 1]} : vector<2x8x96xf32> to vector<2x8x8xf32>
    %33 = vector.extract_strided_slice %7 {offsets = [0, 0, 72], sizes = [2, 8, 8], strides = [1, 1, 1]} : vector<2x8x96xf32> to vector<2x8x8xf32>
    "tpu.trace_start"() <{level = 10 : i32, message = "bqk,btk->bqt"}> : () -> ()
    %cst_17 = arith.constant dense<0.000000e+00> : vector<2x8x8xf32>
    %34 = tpu.matmul %31, %32, %cst_17 {dimension_numbers = #tpu.dot_dimension_numbers<[2], [2], [1], [1], [0, 0, 0, 1, 1, 1], [0], [0]>} : vector<2x8x8xf32>, vector<2x8x8xf32>, vector<2x8x8xf32> -> vector<2x8x8xf32>
    %cst_18 = arith.constant -1.000000e+09 : f32
    "tpu.trace_stop"() : () -> ()
    %35 = vector.broadcast %cst_18 : f32 to vector<2x8x8xf32>
    %36 = arith.select %12, %35, %34 : vector<2x8x8xi1>, vector<2x8x8xf32>
    %cst_19 = arith.constant dense<0xFF800000> : vector<2x8xf32>
    %37 = vector.multi_reduction <maximumf>, %36, %cst_19 [2] : vector<2x8x8xf32> to vector<2x8xf32>
    %38 = vector.shape_cast %37 : vector<2x8xf32> to vector<2x8x1xf32>
    %39 = vector.broadcast %38 : vector<2x8x1xf32> to vector<2x8x8xf32>
    %40 = arith.subf %36, %39 : vector<2x8x8xf32>
    %41 = math.exp %40 : vector<2x8x8xf32>
    %cst_20 = arith.constant dense<0.000000e+00> : vector<2x8xf32>
    %42 = vector.multi_reduction <add>, %41, %cst_20 [2] : vector<2x8x8xf32> to vector<2x8xf32>
    %43 = vector.shape_cast %42 : vector<2x8xf32> to vector<2x8x1xf32>
    %44 = vector.broadcast %43 : vector<2x8x1xf32> to vector<2x8x8xf32>
    %45 = arith.divf %41, %44 : vector<2x8x8xf32>
    "tpu.trace_start"() <{level = 10 : i32, message = "bqt,btk->bqk"}> : () -> ()
    %cst_21 = arith.constant dense<0.000000e+00> : vector<2x8x8xf32>
    %46 = tpu.matmul %45, %33, %cst_21 {dimension_numbers = #tpu.dot_dimension_numbers<[2], [1], [1], [2], [0, 0, 0, 1, 1, 2], [0], [0]>} : vector<2x8x8xf32>, vector<2x8x8xf32>, vector<2x8x8xf32> -> vector<2x8x8xf32>
    "tpu.trace_stop"() : () -> ()
    %47 = vector.shape_cast %46 : vector<2x8x8xf32> to vector<16x8xf32>
    %c0_22 = arith.constant 0 : index
    %c8 = arith.constant 8 : index
    %48 = vector.load %arg15[%c0_22, %c8] : memref<16x32xf32, #tpu.memory_space<vmem>>, vector<16x8xf32>
    tpu.vector_store %arg15[%c0_22, %c8], %47 {strides = array<i32>} : memref<16x32xf32, #tpu.memory_space<vmem>>, vector<16x8xf32>,
    %49 = vector.extract_strided_slice %7 {offsets = [0, 0, 16], sizes = [2, 8, 8], strides = [1, 1, 1]} : vector<2x8x96xf32> to vector<2x8x8xf32>
    %50 = vector.extract_strided_slice %7 {offsets = [0, 0, 48], sizes = [2, 8, 8], strides = [1, 1, 1]} : vector<2x8x96xf32> to vector<2x8x8xf32>
    %51 = vector.extract_strided_slice %7 {offsets = [0, 0, 80], sizes = [2, 8, 8], strides = [1, 1, 1]} : vector<2x8x96xf32> to vector<2x8x8xf32>
    "tpu.trace_start"() <{level = 10 : i32, message = "bqk,btk->bqt"}> : () -> ()
    %cst_23 = arith.constant dense<0.000000e+00> : vector<2x8x8xf32>
    %52 = tpu.matmul %49, %50, %cst_23 {dimension_numbers = #tpu.dot_dimension_numbers<[2], [2], [1], [1], [0, 0, 0, 1, 1, 1], [0], [0]>} : vector<2x8x8xf32>, vector<2x8x8xf32>, vector<2x8x8xf32> -> vector<2x8x8xf32>
    %cst_24 = arith.constant -1.000000e+09 : f32
    "tpu.trace_stop"() : () -> ()
    %53 = vector.broadcast %cst_24 : f32 to vector<2x8x8xf32>
    %54 = arith.select %12, %53, %52 : vector<2x8x8xi1>, vector<2x8x8xf32>
    %cst_25 = arith.constant dense<0xFF800000> : vector<2x8xf32>
    %55 = vector.multi_reduction <maximumf>, %54, %cst_25 [2] : vector<2x8x8xf32> to vector<2x8xf32>
    %56 = vector.shape_cast %55 : vector<2x8xf32> to vector<2x8x1xf32>
    %57 = vector.broadcast %56 : vector<2x8x1xf32> to vector<2x8x8xf32>
    %58 = arith.subf %54, %57 : vector<2x8x8xf32>
    %59 = math.exp %58 : vector<2x8x8xf32>
    %cst_26 = arith.constant dense<0.000000e+00> : vector<2x8xf32>
    %60 = vector.multi_reduction <add>, %59, %cst_26 [2] : vector<2x8x8xf32> to vector<2x8xf32>
    %61 = vector.shape_cast %60 : vector<2x8xf32> to vector<2x8x1xf32>
    %62 = vector.broadcast %61 : vector<2x8x1xf32> to vector<2x8x8xf32>
    %63 = arith.divf %59, %62 : vector<2x8x8xf32>
    "tpu.trace_start"() <{level = 10 : i32, message = "bqt,btk->bqk"}> : () -> ()
    %cst_27 = arith.constant dense<0.000000e+00> : vector<2x8x8xf32>
    %64 = tpu.matmul %63, %51, %cst_27 {dimension_numbers = #tpu.dot_dimension_numbers<[2], [1], [1], [2], [0, 0, 0, 1, 1, 2], [0], [0]>} : vector<2x8x8xf32>, vector<2x8x8xf32>, vector<2x8x8xf32> -> vector<2x8x8xf32>
    "tpu.trace_stop"() : () -> ()
    %65 = vector.shape_cast %64 : vector<2x8x8xf32> to vector<16x8xf32>
    %c0_28 = arith.constant 0 : index
    %c16 = arith.constant 16 : index
    %66 = vector.load %arg15[%c0_28, %c16] : memref<16x32xf32, #tpu.memory_space<vmem>>, vector<16x8xf32>
    tpu.vector_store %arg15[%c0_28, %c16], %65 {strides = array<i32>} : memref<16x32xf32, #tpu.memory_space<vmem>>, vector<16x8xf32>,
    %67 = vector.extract_strided_slice %7 {offsets = [0, 0, 24], sizes = [2, 8, 8], strides = [1, 1, 1]} : vector<2x8x96xf32> to vector<2x8x8xf32>
    %68 = vector.extract_strided_slice %7 {offsets = [0, 0, 56], sizes = [2, 8, 8], strides = [1, 1, 1]} : vector<2x8x96xf32> to vector<2x8x8xf32>
    %69 = vector.extract_strided_slice %7 {offsets = [0, 0, 88], sizes = [2, 8, 8], strides = [1, 1, 1]} : vector<2x8x96xf32> to vector<2x8x8xf32>
    "tpu.trace_start"() <{level = 10 : i32, message = "bqk,btk->bqt"}> : () -> ()
    %cst_29 = arith.constant dense<0.000000e+00> : vector<2x8x8xf32>
    %70 = tpu.matmul %67, %68, %cst_29 {dimension_numbers = #tpu.dot_dimension_numbers<[2], [2], [1], [1], [0, 0, 0, 1, 1, 1], [0], [0]>} : vector<2x8x8xf32>, vector<2x8x8xf32>, vector<2x8x8xf32> -> vector<2x8x8xf32>
    %cst_30 = arith.constant -1.000000e+09 : f32
    "tpu.trace_stop"() : () -> ()
    %71 = vector.broadcast %cst_30 : f32 to vector<2x8x8xf32>
    %72 = arith.select %12, %71, %70 : vector<2x8x8xi1>, vector<2x8x8xf32>
    %cst_31 = arith.constant dense<0xFF800000> : vector<2x8xf32>
    %73 = vector.multi_reduction <maximumf>, %72, %cst_31 [2] : vector<2x8x8xf32> to vector<2x8xf32>
    %74 = vector.shape_cast %73 : vector<2x8xf32> to vector<2x8x1xf32>
    %75 = vector.broadcast %74 : vector<2x8x1xf32> to vector<2x8x8xf32>
    %76 = arith.subf %72, %75 : vector<2x8x8xf32>
    %77 = math.exp %76 : vector<2x8x8xf32>
    %cst_32 = arith.constant dense<0.000000e+00> : vector<2x8xf32>
    %78 = vector.multi_reduction <add>, %77, %cst_32 [2] : vector<2x8x8xf32> to vector<2x8xf32>
    %79 = vector.shape_cast %78 : vector<2x8xf32> to vector<2x8x1xf32>
    %80 = vector.broadcast %79 : vector<2x8x1xf32> to vector<2x8x8xf32>
    %81 = arith.divf %77, %80 : vector<2x8x8xf32>
    "tpu.trace_start"() <{level = 10 : i32, message = "bqt,btk->bqk"}> : () -> ()
    %cst_33 = arith.constant dense<0.000000e+00> : vector<2x8x8xf32>
    %82 = tpu.matmul %81, %69, %cst_33 {dimension_numbers = #tpu.dot_dimension_numbers<[2], [1], [1], [2], [0, 0, 0, 1, 1, 2], [0], [0]>} : vector<2x8x8xf32>, vector<2x8x8xf32>, vector<2x8x8xf32> -> vector<2x8x8xf32>
    "tpu.trace_stop"() : () -> ()
    %83 = vector.shape_cast %82 : vector<2x8x8xf32> to vector<16x8xf32>
    %c0_34 = arith.constant 0 : index
    %c24 = arith.constant 24 : index
    %84 = vector.load %arg15[%c0_34, %c24] : memref<16x32xf32, #tpu.memory_space<vmem>>, vector<16x8xf32>
    tpu.vector_store %arg15[%c0_34, %c24], %83 {strides = array<i32>} : memref<16x32xf32, #tpu.memory_space<vmem>>, vector<16x8xf32>,
    %85 = vector.shape_cast %27 : vector<2x8x8xf32> to vector<2x1x8x8xf32>
    %86 = vector.shape_cast %45 : vector<2x8x8xf32> to vector<2x1x8x8xf32>
    %87 = vector.shape_cast %63 : vector<2x8x8xf32> to vector<2x1x8x8xf32>
    %88 = vector.shape_cast %81 : vector<2x8x8xf32> to vector<2x1x8x8xf32>
    %89 = tpu.concatenate %85, %86, %87, %88 in 1 : vector<2x1x8x8xf32>, vector<2x1x8x8xf32>, vector<2x1x8x8xf32>, vector<2x1x8x8xf32> -> vector<2x4x8x8xf32>
    %c0_35 = arith.constant 0 : index
    %c0_36 = arith.constant 0 : index
    %c0_37 = arith.constant 0 : index
    %c0_38 = arith.constant 0 : index
    %90 = vector.load %arg14[%c0_35, %c0_36, %c0_37, %c0_38] : memref<2x4x8x8xf32, #tpu.memory_space<vmem>>, vector<2x4x8x8xf32>
    tpu.vector_store %arg14[%c0_35, %c0_36, %c0_37, %c0_38], %89 {strides = array<i32>} : memref<2x4x8x8xf32, #tpu.memory_space<vmem>>, vector<2x4x8x8xf32>,
    %c0_39 = arith.constant 0 : index
    %c0_40 = arith.constant 0 : index
    %91 = vector.load %arg15[%c0_39, %c0_40] : memref<16x32xf32, #tpu.memory_space<vmem>>, vector<16x32xf32>
    %c0_41 = arith.constant 0 : index
    %c0_42 = arith.constant 0 : index
    %92 = vector.load %arg5[%c0_41, %c0_42] : memref<32x32xf32, #tpu.memory_space<vmem>>, vector<32x32xf32>
    %cst_43 = arith.constant dense<0.000000e+00> : vector<16x32xf32>
    %93 = tpu.matmul %91, %92, %cst_43 {dimension_numbers = #tpu.dot_dimension_numbers<[1], [0], [0], [1], [0, 0, 1, 1], [], []>} : vector<16x32xf32>, vector<32x32xf32>, vector<16x32xf32> -> vector<16x32xf32>
    %c0_44 = arith.constant 0 : index
    %c0_45 = arith.constant 0 : index
    %94 = vector.load %arg6[%c0_44, %c0_45] : memref<1x32xf32, #tpu.memory_space<vmem>>, vector<1x32xf32>
    %95 = vector.broadcast %94 : vector<1x32xf32> to vector<16x32xf32>
    %96 = arith.addf %93, %95 : vector<16x32xf32>
    %c0_46 = arith.constant 0 : index
    %c0_47 = arith.constant 0 : index
    %97 = vector.load %arg7[%c0_46, %c0_47] : memref<32x64xf32, #tpu.memory_space<vmem>>, vector<32x64xf32>
    %cst_48 = arith.constant dense<0.000000e+00> : vector<16x64xf32>
    %98 = tpu.matmul %96, %97, %cst_48 {dimension_numbers = #tpu.dot_dimension_numbers<[1], [0], [0], [1], [0, 0, 1, 1], [], []>} : vector<16x32xf32>, vector<32x64xf32>, vector<16x64xf32> -> vector<16x64xf32>
    %c0_49 = arith.constant 0 : index
    %c0_50 = arith.constant 0 : index
    %99 = vector.load %arg8[%c0_49, %c0_50] : memref<1x64xf32, #tpu.memory_space<vmem>>, vector<1x64xf32>
    %100 = vector.broadcast %99 : vector<1x64xf32> to vector<16x64xf32>
    %101 = arith.addf %98, %100 : vector<16x64xf32>
    %cst_51 = arith.constant dense<0.000000e+00> : vector<64xf32>
    %102 = vector.multi_reduction <add>, %101, %cst_51 [0] : vector<16x64xf32> to vector<64xf32>
    %103 = vector.shape_cast %102 : vector<64xf32> to vector<1x64xf32>
    %104 = arith.mulf %101, %101 : vector<16x64xf32>
    %cst_52 = arith.constant dense<0.000000e+00> : vector<64xf32>
    %105 = vector.multi_reduction <add>, %104, %cst_52 [0] : vector<16x64xf32> to vector<64xf32>
    %106 = vector.shape_cast %105 : vector<64xf32> to vector<1x64xf32>
    %cst_53 = arith.constant 6.250000e-02 : f32
    %107 = vector.broadcast %cst_53 : f32 to vector<1x64xf32>
    %108 = arith.mulf %103, %107 : vector<1x64xf32>
    %cst_54 = arith.constant 6.250000e-02 : f32
    %109 = vector.broadcast %cst_54 : f32 to vector<1x64xf32>
    %110 = arith.mulf %106, %109 : vector<1x64xf32>
    %111 = arith.mulf %108, %108 : vector<1x64xf32>
    %112 = arith.subf %110, %111 : vector<1x64xf32>
    %cst_55 = arith.constant 0.000000e+00 : f32
    %113 = vector.broadcast %cst_55 : f32 to vector<1x64xf32>
    %114 = arith.maximumf %112, %113 : vector<1x64xf32>
    %115 = vector.broadcast %108 : vector<1x64xf32> to vector<16x64xf32>
    %116 = arith.subf %101, %115 : vector<16x64xf32>
    %cst_56 = arith.constant 9.99999974E-6 : f32
    %117 = vector.broadcast %cst_56 : f32 to vector<1x64xf32>
    %118 = arith.addf %114, %117 : vector<1x64xf32>
    %119 = math.rsqrt %118 : vector<1x64xf32>
    %120 = vector.broadcast %119 : vector<1x64xf32> to vector<16x64xf32>
    %121 = arith.mulf %116, %120 : vector<16x64xf32>
    %c0_57 = arith.constant 0 : index
    %c0_58 = arith.constant 0 : index
    %122 = vector.load %arg9[%c0_57, %c0_58] : memref<1x64xf32, #tpu.memory_space<vmem>>, vector<1x64xf32>
    %123 = vector.broadcast %122 : vector<1x64xf32> to vector<16x64xf32>
    %124 = arith.mulf %121, %123 : vector<16x64xf32>
    %c0_59 = arith.constant 0 : index
    %c0_60 = arith.constant 0 : index
    %125 = vector.load %arg10[%c0_59, %c0_60] : memref<1x64xf32, #tpu.memory_space<vmem>>, vector<1x64xf32>
    %126 = vector.broadcast %125 : vector<1x64xf32> to vector<16x64xf32>
    %127 = arith.addf %124, %126 : vector<16x64xf32>
    %128 = math.tanh %127 : vector<16x64xf32>
    %c0_61 = arith.constant 0 : index
    %c0_62 = arith.constant 0 : index
    %129 = vector.load %arg11[%c0_61, %c0_62] : memref<64x32xf32, #tpu.memory_space<vmem>>, vector<64x32xf32>
    %cst_63 = arith.constant dense<0.000000e+00> : vector<16x32xf32>
    %130 = tpu.matmul %128, %129, %cst_63 {dimension_numbers = #tpu.dot_dimension_numbers<[1], [0], [0], [1], [0, 0, 1, 1], [], []>} : vector<16x64xf32>, vector<64x32xf32>, vector<16x32xf32> -> vector<16x32xf32>
    %c0_64 = arith.constant 0 : index
    %c0_65 = arith.constant 0 : index
    %131 = vector.load %arg12[%c0_64, %c0_65] : memref<1x32xf32, #tpu.memory_space<vmem>>, vector<1x32xf32>
    %132 = vector.broadcast %131 : vector<1x32xf32> to vector<16x32xf32>
    %133 = arith.addf %130, %132 : vector<16x32xf32>
    %134 = arith.addf %96, %133 : vector<16x32xf32>
    %c0_66 = arith.constant 0 : index
    %c0_67 = arith.constant 0 : index
    %135 = vector.load %arg13[%c0_66, %c0_67] : memref<16x32xf32, #tpu.memory_space<vmem>>, vector<16x32xf32>
    tpu.vector_store %arg13[%c0_66, %c0_67], %134 {strides = array<i32>} : memref<16x32xf32, #tpu.memory_space<vmem>>, vector<16x32xf32>,
    return
  }
  func.func @transform_0(%arg0: i32) -> (i32, i32, i32) {
    %c0_i32 = arith.constant 0 : i32
    %c0_i32_0 = arith.constant 0 : i32
    %c0_i32_1 = arith.constant 0 : i32
    %c0_i32_2 = arith.constant 0 : i32
    return %c0_i32, %c0_i32_0, %c0_i32_1 : i32, i32, i32
  }
  func.func @transform_1(%arg0: i32) -> (i32, i32, i32) {
    %c0_i32 = arith.constant 0 : i32
    %c0_i32_0 = arith.constant 0 : i32
    %c0_i32_1 = arith.constant 0 : i32
    %c0_i32_2 = arith.constant 0 : i32
    return %c0_i32, %c0_i32_0, %c0_i32_1 : i32, i32, i32
  }
  func.func @transform_2(%arg0: i32) -> (i32, i32) {
    %c0_i32 = arith.constant 0 : i32
    %c0_i32_0 = arith.constant 0 : i32
    %c0_i32_1 = arith.constant 0 : i32
    return %c0_i32, %c0_i32_0 : i32, i32
  }
  func.func @transform_3(%arg0: i32) -> (i32, i32) {
    %c0_i32 = arith.constant 0 : i32
    %c0_i32_0 = arith.constant 0 : i32
    %c0_i32_1 = arith.constant 0 : i32
    return %c0_i32, %c0_i32_0 : i32, i32
  }
  func.func @transform_4(%arg0: i32) -> (i32, i32) {
    %c0_i32 = arith.constant 0 : i32
    %c0_i32_0 = arith.constant 0 : i32
    %c0_i32_1 = arith.constant 0 : i32
    return %c0_i32, %c0_i32_0 : i32, i32
  }
  func.func @transform_5(%arg0: i32) -> (i32, i32) {
    %c0_i32 = arith.constant 0 : i32
    %c0_i32_0 = arith.constant 0 : i32
    %c0_i32_1 = arith.constant 0 : i32
    return %c0_i32, %c0_i32_0 : i32, i32
  }
  func.func @transform_6(%arg0: i32) -> (i32, i32) {
    %c0_i32 = arith.constant 0 : i32
    %c0_i32_0 = arith.constant 0 : i32
    %c0_i32_1 = arith.constant 0 : i32
    return %c0_i32, %c0_i32_0 : i32, i32
  }
  func.func @transform_7(%arg0: i32) -> (i32, i32) {
    %c0_i32 = arith.constant 0 : i32
    %c0_i32_0 = arith.constant 0 : i32
    %c0_i32_1 = arith.constant 0 : i32
    return %c0_i32, %c0_i32_0 : i32, i32
  }
  func.func @transform_8(%arg0: i32) -> (i32, i32) {
    %c0_i32 = arith.constant 0 : i32
    %c0_i32_0 = arith.constant 0 : i32
    %c0_i32_1 = arith.constant 0 : i32
    return %c0_i32, %c0_i32_0 : i32, i32
  }
  func.func @transform_9(%arg0: i32) -> (i32, i32) {
    %c0_i32 = arith.constant 0 : i32
    %c0_i32_0 = arith.constant 0 : i32
    %c0_i32_1 = arith.constant 0 : i32
    return %c0_i32, %c0_i32_0 : i32, i32
  }
  func.func @transform_10(%arg0: i32) -> (i32, i32) {
    %c0_i32 = arith.constant 0 : i32
    %c0_i32_0 = arith.constant 0 : i32
    %c0_i32_1 = arith.constant 0 : i32
    return %c0_i32, %c0_i32_0 : i32, i32
  }
  func.func @transform_11(%arg0: i32) -> (i32, i32) {
    %c0_i32 = arith.constant 0 : i32
    %c0_i32_0 = arith.constant 0 : i32
    %c0_i32_1 = arith.constant 0 : i32
    return %c0_i32, %c0_i32_0 : i32, i32
  }
  func.func @transform_12(%arg0: i32) -> (i32, i32) {
    %c0_i32 = arith.constant 0 : i32
    %c0_i32_0 = arith.constant 0 : i32
    %c0_i32_1 = arith.constant 0 : i32
    return %c0_i32, %c0_i32_0 : i32, i32
  }
  func.func @transform_13(%arg0: i32) -> (i32, i32, i32, i32) {
    %c0_i32 = arith.constant 0 : i32
    %c0_i32_0 = arith.constant 0 : i32
    %c0_i32_1 = arith.constant 0 : i32
    %c0_i32_2 = arith.constant 0 : i32
    %c0_i32_3 = arith.constant 0 : i32
    return %c0_i32, %c0_i32_0, %c0_i32_1, %c0_i32_2 : i32, i32, i32, i32
  }
}

</mosaic_0001>

<llo_original>
// kernel: tpu_custom_call.1
$region0: #{tpu_custom_call.1}
  #allocation0 [shape = 'u32[]', space=smem, size = 0x4, offset = 0x4, fixed_abs, tag = 'smem constant byte address 0x4 - core index']
  #allocation1 [shape = 'u32[144,128]{1,0:T(1,128)}', space=vmem, size = 0x12000, scoped, tag = 'internal scratch']
  #allocation2 [shape = 'f32[16,32]{1,0:T(8,128)}', space=vmem, size = 0x2000, scoped, tag = 'scratch operand']
  %s0 = inlined_call_operand.hbm [shape: f32[2,8,32], index: 0, kind: input, shape index: {}]
  %s1 = inlined_call_operand.hbm [shape: f32[2,1,8], index: 1, kind: input, shape index: {}]
  %s2 = inlined_call_operand.vmem [shape: f32[32,96], index: 2, kind: input, shape index: {}]
  %s3 = inlined_call_operand.vmem [shape: f32[1,96], index: 3, kind: input, shape index: {}]
  %s4 = inlined_call_operand.vmem [shape: f32[32,32], index: 4, kind: input, shape index: {}]
  %s5 = inlined_call_operand.vmem [shape: f32[1,32], index: 5, kind: input, shape index: {}]
  %s6 = inlined_call_operand.vmem [shape: f32[32,64], index: 6, kind: input, shape index: {}]
  %s7 = inlined_call_operand.vmem [shape: f32[1,64], index: 7, kind: input, shape index: {}]
  %s8 = inlined_call_operand.vmem [shape: f32[1,64], index: 8, kind: input, shape index: {}]
  %s9 = inlined_call_operand.vmem [shape: f32[1,64], index: 9, kind: input, shape index: {}]
  %s10 = inlined_call_operand.vmem [shape: f32[64,32], index: 10, kind: input, shape index: {}]
  %s11 = inlined_call_operand.vmem [shape: f32[1,32], index: 11, kind: input, shape index: {}]
  %s12 = inlined_call_operand.hbm [shape: f32[16,32], index: 12, kind: output, shape index: {0}]
  %s13 = inlined_call_operand.hbm [shape: f32[2,4,8,8], index: 13, kind: output, shape index: {1}]
  %14 = xla_tuple %s12, %s13
  %s15 = sld [smem:[#allocation0]]
  $region74: #{tpu_custom_call.1} parent=0
    _
  %s17 = ssub.s32 1, %s15
  %s18 = scalar_select 0, %s17, %s15
  $region1: #{tpu_custom_call.1} parent=0
    #allocation3 [shape = 'u8[8192]{0}', space=vmem, size = 0x2000, scoped, tag = 'input window, operand 0, single buffered']
    #allocation4 [shape = 's32[1]{0}', space=sflag, size = 0x4, scoped, tag = 'scoped memory for tpu_custom_call.1']
    #allocation5 [shape = 's32[1]{0}', space=sflag, size = 0x4, scoped, tag = 'scoped memory for tpu_custom_call.1']
    #allocation6 [shape = 'u8[1024]{0}', space=vmem, size = 0x400, scoped, tag = 'input window, operand 1, single buffered']
    #allocation7 [shape = 's32[1]{0}', space=sflag, size = 0x4, scoped, tag = 'scoped memory for tpu_custom_call.1']
    #allocation8 [shape = 'u8[8192]{0}', space=vmem, size = 0x2000, scoped, tag = 'output window, operand 0, single buffered']
    #allocation9 [shape = 'u8[32768]{0}', space=vmem, size = 0x8000, scoped, tag = 'output window, operand 1, single buffered']
    #allocation10 [shape = 's32[1]{0}', space=sflag, size = 0x4, scoped, tag = 'scoped memory for tpu_custom_call.1']
    %19 = vsyncpa [#allocation4], 0
    %20 = vsyncpa [#allocation7], 0
    %21 = vsyncpa [#allocation5], 0
    %22 = vsyncpa [#allocation10], 0
    // Predicated region
    $region2: #{tpu_custom_call.1} parent=1 // pred_check
      _
    $region3: #{tpu_custom_call.1} parent=1 // pred_check_branch
      %24 = sbr.rel (0) target = $region5
    $region4: #{tpu_custom_call.1} parent=1 // pred_region
      %s26 = ssub.s32 256, 256
      %27 = vsyncadd [#allocation4], %s26
      %s28 = sshll.u32 [#allocation3], 4
      %s29 = int_to_ptr.vmem [resolvable:$true] %s28
      %34 = dma.hbm_to_vmem [thread:$0]  %s0, 256, %s29, [#allocation4], 128, 128, 8
    $region5: #{tpu_custom_call.1} parent=1 // pred_fallthru
      _
    // Predicated region
    $region6: #{tpu_custom_call.1} parent=1 // pred_check
      _
    $region7: #{tpu_custom_call.1} parent=1 // pred_check_branch
      %36 = sbr.rel (0) target = $region9
    $region8: #{tpu_custom_call.1} parent=1 // pred_region
      %s38 = ssub.s32 32, 32
      %39 = vsyncadd [#allocation7], %s38
      %s40 = sshll.u32 [#allocation6], 4
      %s41 = int_to_ptr.vmem [resolvable:$true] %s40
      %46 = dma.hbm_to_vmem [thread:$0]  %s1, 32, %s41, [#allocation7], 16, 16, 1
    $region9: #{tpu_custom_call.1} parent=1 // pred_fallthru
      _
    // Predicated region
    $region10: #{tpu_custom_call.1} parent=1 // pred_check
      _
    $region11: #{tpu_custom_call.1} parent=1 // pred_check_branch
      %48 = sbr.rel (0) target = $region13
    $region12: #{tpu_custom_call.1} parent=1 // pred_region
      _
    $region13: #{tpu_custom_call.1} parent=1 // pred_fallthru
      _
    // Predicated region
    $region14: #{tpu_custom_call.1} parent=1 // pred_check
      _
    $region15: #{tpu_custom_call.1} parent=1 // pred_check_branch
      %50 = sbr.rel (0) target = $region17
    $region16: #{tpu_custom_call.1} parent=1 // pred_region
      _
    $region17: #{tpu_custom_call.1} parent=1 // pred_fallthru
      _
    // Predicated region
    $region18: #{tpu_custom_call.1} parent=1 // pred_check
      _
    $region19: #{tpu_custom_call.1} parent=1 // pred_check_branch
      %52 = sbr.rel (0) target = $region21
    $region20: #{tpu_custom_call.1} parent=1 // pred_region
      _
    $region21: #{tpu_custom_call.1} parent=1 // pred_fallthru
      _
    // Predicated region
    $region22: #{tpu_custom_call.1} parent=1 // pred_check
      _
    $region23: #{tpu_custom_call.1} parent=1 // pred_check_branch
      %54 = sbr.rel (0) target = $region25
    $region24: #{tpu_custom_call.1} parent=1 // pred_region
      _
    $region25: #{tpu_custom_call.1} parent=1 // pred_fallthru
      _
    // Predicated region
    $region26: #{tpu_custom_call.1} parent=1 // pred_check
      _
    $region27: #{tpu_custom_call.1} parent=1 // pred_check_branch
      %56 = sbr.rel (0) target = $region29
    $region28: #{tpu_custom_call.1} parent=1 // pred_region
      _
    $region29: #{tpu_custom_call.1} parent=1 // pred_fallthru
      _
    // Predicated region
    $region30: #{tpu_custom_call.1} parent=1 // pred_check
      _
    $region31: #{tpu_custom_call.1} parent=1 // pred_check_branch
      %58 = sbr.rel (0) target = $region33
    $region32: #{tpu_custom_call.1} parent=1 // pred_region
      _
    $region33: #{tpu_custom_call.1} parent=1 // pred_fallthru
      _
    // Predicated region
    $region34: #{tpu_custom_call.1} parent=1 // pred_check
      _
    $region35: #{tpu_custom_call.1} parent=1 // pred_check_branch
      %60 = sbr.rel (0) target = $region37
    $region36: #{tpu_custom_call.1} parent=1 // pred_region
      _
    $region37: #{tpu_custom_call.1} parent=1 // pred_fallthru
      _
    // Predicated region
    $region38: #{tpu_custom_call.1} parent=1 // pred_check
      _
    $region39: #{tpu_custom_call.1} parent=1 // pred_check_branch
      %62 = sbr.rel (0) target = $region41
    $region40: #{tpu_custom_call.1} parent=1 // pred_region
      _
    $region41: #{tpu_custom_call.1} parent=1 // pred_fallthru
      _
    // Predicated region
    $region42: #{tpu_custom_call.1} parent=1 // pred_check
      _
    $region43: #{tpu_custom_call.1} parent=1 // pred_check_branch
      %64 = sbr.rel (0) target = $region45
    $region44: #{tpu_custom_call.1} parent=1 // pred_region
      _
    $region45: #{tpu_custom_call.1} parent=1 // pred_fallthru
      _
    // Predicated region
    $region46: #{tpu_custom_call.1} parent=1 // pred_check
      _
    $region47: #{tpu_custom_call.1} parent=1 // pred_check_branch
      %66 = sbr.rel (0) target = $region49
    $region48: #{tpu_custom_call.1} parent=1 // pred_region
      _
    $region49: #{tpu_custom_call.1} parent=1 // pred_fallthru
      _
    // Predicated region
    $region50: #{tpu_custom_call.1} parent=1 // pred_check
      _
    $region51: #{tpu_custom_call.1} parent=1 // pred_check_branch
      %68 = sbr.rel (0) target = $region53
    $region52: #{tpu_custom_call.1} parent=1 // pred_region
      %69 = dma.done [#allocation4], 256
    $region53: #{tpu_custom_call.1} parent=1 // pred_fallthru
      _
    // Predicated region
    $region54: #{tpu_custom_call.1} parent=1 // pred_check
      _
    $region55: #{tpu_custom_call.1} parent=1 // pred_check_branch
      %71 = sbr.rel (0) target = $region57
    $region56: #{tpu_custom_call.1} parent=1 // pred_region
      %72 = dma.done [#allocation7], 32
    $region57: #{tpu_custom_call.1} parent=1 // pred_fallthru
      _
    %v73 = vld [vmem:[#allocation3] sm:$0xff]
    %v74 = vld [vmem:[#allocation3 + $0x8] sm:$0xff]
    %v75 = vld [vmem:[%s2] sm:$0xff]
    %v76 = vld [vmem:[%s2 + $0x8] sm:$0xff]
    %v77 = vld [vmem:[%s2 + $0x10] sm:$0xff]
    %v78 = vld [vmem:[%s2 + $0x18] sm:$0xff]
    %v79 = vld [vmem:[%s3] sm:$0x1]
    %v81 = vlaneseq
    %v82 = vshrl.u32 %v81, 7
    %v83 = vsub.s32 0, %v82
    %v84 = vrot.slane %v79, %v83
    %vm86 = vcmask 261120
    %v88 = vsel %vm86, %v73, 0
    %v91 = vsel %vm86, %v74, 0
    %93 = vmatprep.subr.mxu0 0.0
    %94 = vmatpush1.msra.mxu0 0.0
    %95 = vmatprep.subr.mxu0 0.0
    %96 = vmatpush1.msra.mxu0 0.0
    %97 = vmatprep.subr.mxu0 0.0
    %98 = vmatpush1.msra.mxu0 0.0
    %99 = vmatprep.subr.mxu0 0.0
    %100 = vmatpush1.msra.mxu0 0.0
    %101 = vmatprep.subr.mxu0 0.0
    %102 = vmatpush1.msra.mxu0 0.0
    %103 = vmatprep.subr.mxu0 0.0
    %104 = vmatpush1.msra.mxu0 0.0
    %105 = vmatprep.subr.mxu0 0.0
    %106 = vmatpush1.msra.mxu0 0.0
    %107 = vmatprep.subr.mxu0 0.0
    %108 = vmatpush1.msra.mxu0 0.0
    %109 = vmatprep.subr.mxu0 0.0
    %110 = vmatpush1.msra.mxu0 0.0
    %111 = vmatprep.subr.mxu0 0.0
    %112 = vmatpush1.msra.mxu0 0.0
    %113 = vmatprep.subr.mxu0 0.0
    %114 = vmatpush1.msra.mxu0 0.0
    %115 = vmatprep.subr.mxu0 0.0
    %116 = vmatpush1.msra.mxu0 0.0
    %117 = vmatprep.subr.mxu0 0.0
    %118 = vmatpush1.msra.mxu0 %v78
    %119 = vmatprep.subr.mxu0 0.0
    %120 = vmatpush1.msra.mxu0 %v77
    %121 = vmatprep.subr.mxu0 0.0
    %122 = vmatpush1.msra.mxu0 %v76
    %123 = vmatprep.subr.mxu0 0.0
    %124 = vmatpush1.msra.mxu0 %v75
    %125 = vmatprep.subr.mxu0 0.0
    %126 = vmatpush2.msra.mxu0 0.0
    %127 = vmatprep.subr.mxu0 0.0
    %128 = vmatpush2.msra.mxu0 0.0
    %129 = vmatprep.subr.mxu0 0.0
    %130 = vmatpush2.msra.mxu0 0.0
    %131 = vmatprep.subr.mxu0 0.0
    %132 = vmatpush2.msra.mxu0 0.0
    %133 = vmatprep.subr.mxu0 0.0
    %134 = vmatpush2.msra.mxu0 0.0
    %135 = vmatprep.subr.mxu0 0.0
    %136 = vmatpush2.msra.mxu0 0.0
    %137 = vmatprep.subr.mxu0 0.0
    %138 = vmatpush2.msra.mxu0 0.0
    %139 = vmatprep.subr.mxu0 0.0
    %140 = vmatpush2.msra.mxu0 0.0
    %141 = vmatprep.subr.mxu0 0.0
    %142 = vmatpush2.msra.mxu0 0.0
    %143 = vmatprep.subr.mxu0 0.0
    %144 = vmatpush2.msra.mxu0 0.0
    %145 = vmatprep.subr.mxu0 0.0
    %146 = vmatpush2.msra.mxu0 0.0
    %147 = vmatprep.subr.mxu0 0.0
    %148 = vmatpush2.msra.mxu0 0.0
    %149 = vmatprep.subr.mxu0 0.0
    %150 = vmatpush2.msra.mxu0 0.0
    %151 = vmatprep.subr.mxu0 0.0
    %152 = vmatpush2.msra.mxu0 0.0
    %153 = vmatprep.subr.mxu0 0.0
    %154 = vmatpush2.msra.mxu0 0.0
    %155 = vmatprep.subr.mxu0 0.0
    %156 = vmatpush2.msra.mxu0 0.0
    %157 = vmatprep.mubr.f32.mxu0 0.0
    %158 = vmatmul.mubr.f32.gmra.mxu0 %v88
    %v159 = vpop.f32.mrf.mxu0
    %v160 = vadd.f32 %v84, %v159
    %v161 = vpop.f32.mrf.mxu0
    %162 = vmatprep.mubr.f32.mxu0 0.0
    %163 = vmatmul.mubr.f32.gmra.mxu0 %v91
    %v164 = vpop.f32.mrf.mxu0
    %v165 = vadd.f32 %v84, %v164
    %v166 = vpop.f32.mrf.mxu0
    %167 = vdwg.mxu0
    %v168 = vld [vmem:[#allocation6] sm:$0x1]
    %v169 = vld [vmem:[#allocation6 + $0x1] sm:$0x1]
    %v172 = vlaneseq
    %v173 = vshrl.u32 %v172, 7
    %v174 = vsub.s32 0, %v173
    %v175 = vrot.slane %v168, %v174
    %v176 = vlaneseq
    %v177 = vshrl.u32 %v176, 7
    %v178 = vsub.s32 0, %v177
    %v179 = vrot.slane %v169, %v178
    %vm182 = vcmp.gt.f32.partialorder %v175, 0.0
    %vm183 = vcmp.gt.f32.partialorder %v179, 0.0
    %185 = vrot.lane.b32.xlu0 %v160, 96
    %v186 = vpop.permute.xlu0 %185
    %vm187 = vcmask 64512
    %v188 = vsel %vm187, %v160, 0
    %v190 = vsel %vm187, %v186, 0
    %192 = vmatprep.subr.mxu0 0.0
    %193 = vmatpush1.xpose.msra.mxu0 0.0
    %194 = vmatprep.subr.mxu0 0.0
    %195 = vmatpush1.xpose.msra.mxu0 0.0
    %196 = vmatprep.subr.mxu0 0.0
    %197 = vmatpush1.xpose.msra.mxu0 0.0
    %198 = vmatprep.subr.mxu0 0.0
    %199 = vmatpush1.xpose.msra.mxu0 0.0
    %200 = vmatprep.subr.mxu0 0.0
    %201 = vmatpush1.xpose.msra.mxu0 0.0
    %202 = vmatprep.subr.mxu0 0.0
    %203 = vmatpush1.xpose.msra.mxu0 0.0
    %204 = vmatprep.subr.mxu0 0.0
    %205 = vmatpush1.xpose.msra.mxu0 0.0
    %206 = vmatprep.subr.mxu0 0.0
    %207 = vmatpush1.xpose.msra.mxu0 0.0
    %208 = vmatprep.subr.mxu0 0.0
    %209 = vmatpush1.xpose.msra.mxu0 0.0
    %210 = vmatprep.subr.mxu0 0.0
    %211 = vmatpush1.xpose.msra.mxu0 0.0
    %212 = vmatprep.subr.mxu0 0.0
    %213 = vmatpush1.xpose.msra.mxu0 0.0
    %214 = vmatprep.subr.mxu0 0.0
    %215 = vmatpush1.xpose.msra.mxu0 0.0
    %216 = vmatprep.subr.mxu0 0.0
    %217 = vmatpush1.xpose.msra.mxu0 0.0
    %218 = vmatprep.subr.mxu0 0.0
    %219 = vmatpush1.xpose.msra.mxu0 0.0
    %220 = vmatprep.subr.mxu0 0.0
    %221 = vmatpush1.xpose.msra.mxu0 0.0
    %222 = vmatprep.subr.mxu0 0.0
    %223 = vmatpush1.xpose.msra.mxu0 %v190
    %224 = vmatprep.subr.mxu0 0.0
    %225 = vmatpush2.xpose.msra.mxu0 0.0
    %226 = vmatprep.subr.mxu0 0.0
    %227 = vmatpush2.xpose.msra.mxu0 0.0
    %228 = vmatprep.subr.mxu0 0.0
    %229 = vmatpush2.xpose.msra.mxu0 0.0
    %230 = vmatprep.subr.mxu0 0.0
    %231 = vmatpush2.xpose.msra.mxu0 0.0
    %232 = vmatprep.subr.mxu0 0.0
    %233 = vmatpush2.xpose.msra.mxu0 0.0
    %234 = vmatprep.subr.mxu0 0.0
    %235 = vmatpush2.xpose.msra.mxu0 0.0
    %236 = vmatprep.subr.mxu0 0.0
    %237 = vmatpush2.xpose.msra.mxu0 0.0
    %238 = vmatprep.subr.mxu0 0.0
    %239 = vmatpush2.xpose.msra.mxu0 0.0
    %240 = vmatprep.subr.mxu0 0.0
    %241 = vmatpush2.xpose.msra.mxu0 0.0
    %242 = vmatprep.subr.mxu0 0.0
    %243 = vmatpush2.xpose.msra.mxu0 0.0
    %244 = vmatprep.subr.mxu0 0.0
    %245 = vmatpush2.xpose.msra.mxu0 0.0
    %246 = vmatprep.subr.mxu0 0.0
    %247 = vmatpush2.xpose.msra.mxu0 0.0
    %248 = vmatprep.subr.mxu0 0.0
    %249 = vmatpush2.xpose.msra.mxu0 0.0
    %250 = vmatprep.subr.mxu0 0.0
    %251 = vmatpush2.xpose.msra.mxu0 0.0
    %252 = vmatprep.subr.mxu0 0.0
    %253 = vmatpush2.xpose.msra.mxu0 0.0
    %254 = vmatprep.subr.mxu0 0.0
    %255 = vmatpush2.xpose.msra.mxu0 0.0
    %256 = vmatprep.mubr.f32.mxu0 0.0
    %257 = vmatmul.mubr.f32.gmra.mxu0 %v188
    %v258 = vpop.f32.mrf.mxu0
    %v259 = vadd.f32 0.0, %v258
    %v260 = vpop.f32.mrf.mxu0
    %261 = vdwg.mxu0
    %263 = vrot.lane.b32.xlu0 %v165, 96
    %v264 = vpop.permute.xlu0 %263
    %v265 = vsel %vm187, %v165, 0
    %v267 = vsel %vm187, %v264, 0
    %269 = vmatprep.subr.mxu0 0.0
    %270 = vmatpush1.xpose.msra.mxu0 0.0
    %271 = vmatprep.subr.mxu0 0.0
    %272 = vmatpush1.xpose.msra.mxu0 0.0
    %273 = vmatprep.subr.mxu0 0.0
    %274 = vmatpush1.xpose.msra.mxu0 0.0
    %275 = vmatprep.subr.mxu0 0.0
    %276 = vmatpush1.xpose.msra.mxu0 0.0
    %277 = vmatprep.subr.mxu0 0.0
    %278 = vmatpush1.xpose.msra.mxu0 0.0
    %279 = vmatprep.subr.mxu0 0.0
    %280 = vmatpush1.xpose.msra.mxu0 0.0
    %281 = vmatprep.subr.mxu0 0.0
    %282 = vmatpush1.xpose.msra.mxu0 0.0
    %283 = vmatprep.subr.mxu0 0.0
    %284 = vmatpush1.xpose.msra.mxu0 0.0
    %285 = vmatprep.subr.mxu0 0.0
    %286 = vmatpush1.xpose.msra.mxu0 0.0
    %287 = vmatprep.subr.mxu0 0.0
    %288 = vmatpush1.xpose.msra.mxu0 0.0
    %289 = vmatprep.subr.mxu0 0.0
    %290 = vmatpush1.xpose.msra.mxu0 0.0
    %291 = vmatprep.subr.mxu0 0.0
    %292 = vmatpush1.xpose.msra.mxu0 0.0
    %293 = vmatprep.subr.mxu0 0.0
    %294 = vmatpush1.xpose.msra.mxu0 0.0
    %295 = vmatprep.subr.mxu0 0.0
    %296 = vmatpush1.xpose.msra.mxu0 0.0
    %297 = vmatprep.subr.mxu0 0.0
    %298 = vmatpush1.xpose.msra.mxu0 0.0
    %299 = vmatprep.subr.mxu0 0.0
    %300 = vmatpush1.xpose.msra.mxu0 %v267
    %301 = vmatprep.subr.mxu0 0.0
    %302 = vmatpush2.xpose.msra.mxu0 0.0
    %303 = vmatprep.subr.mxu0 0.0
    %304 = vmatpush2.xpose.msra.mxu0 0.0
    %305 = vmatprep.subr.mxu0 0.0
    %306 = vmatpush2.xpose.msra.mxu0 0.0
    %307 = vmatprep.subr.mxu0 0.0
    %308 = vmatpush2.xpose.msra.mxu0 0.0
    %309 = vmatprep.subr.mxu0 0.0
    %310 = vmatpush2.xpose.msra.mxu0 0.0
    %311 = vmatprep.subr.mxu0 0.0
    %312 = vmatpush2.xpose.msra.mxu0 0.0
    %313 = vmatprep.subr.mxu0 0.0
    %314 = vmatpush2.xpose.msra.mxu0 0.0
    %315 = vmatprep.subr.mxu0 0.0
    %316 = vmatpush2.xpose.msra.mxu0 0.0
    %317 = vmatprep.subr.mxu0 0.0
    %318 = vmatpush2.xpose.msra.mxu0 0.0
    %319 = vmatprep.subr.mxu0 0.0
    %320 = vmatpush2.xpose.msra.mxu0 0.0
    %321 = vmatprep.subr.mxu0 0.0
    %322 = vmatpush2.xpose.msra.mxu0 0.0
    %323 = vmatprep.subr.mxu0 0.0
    %324 = vmatpush2.xpose.msra.mxu0 0.0
    %325 = vmatprep.subr.mxu0 0.0
    %326 = vmatpush2.xpose.msra.mxu0 0.0
    %327 = vmatprep.subr.mxu0 0.0
    %328 = vmatpush2.xpose.msra.mxu0 0.0
    %329 = vmatprep.subr.mxu0 0.0
    %330 = vmatpush2.xpose.msra.mxu0 0.0
    %331 = vmatprep.subr.mxu0 0.0
    %332 = vmatpush2.xpose.msra.mxu0 0.0
    %333 = vmatprep.mubr.f32.mxu0 0.0
    %334 = vmatmul.mubr.f32.gmra.mxu0 %v265
    %v335 = vpop.f32.mrf.mxu0
    %v336 = vadd.f32 0.0, %v335
    %v337 = vpop.f32.mrf.mxu0
    %338 = vdwg.mxu0
    %v339 = vsel %vm182, -1e+09, %v259
    %v340 = vsel %vm183, -1e+09, %v336
    %v341 = vsel %vm187, %v339, -inf
    %342 = vmax.xlane.f32.xlu0 %v341
    %v343 = vpop.xlane.xlu0 %342
    %v344 = vsel %vm187, %v340, -inf
    %345 = vmax.xlane.f32.xlu0 %v344
    %v346 = vpop.xlane.xlu0 %345
    %v347 = vsub.f32 %v339, %v343
    %v348 = vsub.f32 %v340, %v346
    %v349 = vmul.f32 %v347, 1.442695
    %v350 = vpow.pop %v349
    %v351 = vmul.f32 %v348, 1.442695
    %v352 = vpow.pop %v351
    %v353 = vsel %vm187, %v350, 0.0
    %354 = vadd.xlane.f32.xlu0 %v353
    %v355 = vpop.xlane.xlu0 %354
    %v356 = vsel %vm187, %v352, 0.0
    %357 = vadd.xlane.f32.xlu0 %v356
    %v358 = vpop.xlane.xlu0 %357
    %v359 = vrcp.pop %v355
    %v360 = vmul.f32 %v350, %v359
    %v361 = vrcp.pop %v358
    %v362 = vmul.f32 %v352, %v361
    %363 = vrot.lane.b32.xlu0 %v160, 64
    %v364 = vpop.permute.xlu0 %363
    %v367 = vsel %vm187, %v360, 0
    %369 = vmatprep.subr.mxu0 0.0
    %370 = vmatpush1.msra.mxu0 0.0
    %371 = vmatprep.subr.mxu0 0.0
    %372 = vmatpush1.msra.mxu0 0.0
    %373 = vmatprep.subr.mxu0 0.0
    %374 = vmatpush1.msra.mxu0 0.0
    %375 = vmatprep.subr.mxu0 0.0
    %376 = vmatpush1.msra.mxu0 0.0
    %377 = vmatprep.subr.mxu0 0.0
    %378 = vmatpush1.msra.mxu0 0.0
    %379 = vmatprep.subr.mxu0 0.0
    %380 = vmatpush1.msra.mxu0 0.0
    %381 = vmatprep.subr.mxu0 0.0
    %382 = vmatpush1.msra.mxu0 0.0
    %383 = vmatprep.subr.mxu0 0.0
    %384 = vmatpush1.msra.mxu0 0.0
    %385 = vmatprep.subr.mxu0 0.0
    %386 = vmatpush1.msra.mxu0 0.0
    %387 = vmatprep.subr.mxu0 0.0
    %388 = vmatpush1.msra.mxu0 0.0
    %389 = vmatprep.subr.mxu0 0.0
    %390 = vmatpush1.msra.mxu0 0.0
    %391 = vmatprep.subr.mxu0 0.0
    %392 = vmatpush1.msra.mxu0 0.0
    %393 = vmatprep.subr.mxu0 0.0
    %394 = vmatpush1.msra.mxu0 0.0
    %395 = vmatprep.subr.mxu0 0.0
    %396 = vmatpush1.msra.mxu0 0.0
    %397 = vmatprep.subr.mxu0 0.0
    %398 = vmatpush1.msra.mxu0 0.0
    %399 = vmatprep.subr.mxu0 0.0
    %400 = vmatpush1.msra.mxu0 %v364
    %401 = vmatprep.subr.mxu0 0.0
    %402 = vmatpush2.msra.mxu0 0.0
    %403 = vmatprep.subr.mxu0 0.0
    %404 = vmatpush2.msra.mxu0 0.0
    %405 = vmatprep.subr.mxu0 0.0
    %406 = vmatpush2.msra.mxu0 0.0
    %407 = vmatprep.subr.mxu0 0.0
    %408 = vmatpush2.msra.mxu0 0.0
    %409 = vmatprep.subr.mxu0 0.0
    %410 = vmatpush2.msra.mxu0 0.0
    %411 = vmatprep.subr.mxu0 0.0
    %412 = vmatpush2.msra.mxu0 0.0
    %413 = vmatprep.subr.mxu0 0.0
    %414 = vmatpush2.msra.mxu0 0.0
    %415 = vmatprep.subr.mxu0 0.0
    %416 = vmatpush2.msra.mxu0 0.0
    %417 = vmatprep.subr.mxu0 0.0
    %418 = vmatpush2.msra.mxu0 0.0
    %419 = vmatprep.subr.mxu0 0.0
    %420 = vmatpush2.msra.mxu0 0.0
    %421 = vmatprep.subr.mxu0 0.0
    %422 = vmatpush2.msra.mxu0 0.0
    %423 = vmatprep.subr.mxu0 0.0
    %424 = vmatpush2.msra.mxu0 0.0
    %425 = vmatprep.subr.mxu0 0.0
    %426 = vmatpush2.msra.mxu0 0.0
    %427 = vmatprep.subr.mxu0 0.0
    %428 = vmatpush2.msra.mxu0 0.0
    %429 = vmatprep.subr.mxu0 0.0
    %430 = vmatpush2.msra.mxu0 0.0
    %431 = vmatprep.subr.mxu0 0.0
    %432 = vmatpush2.msra.mxu0 0.0
    %433 = vmatprep.mubr.f32.mxu0 0.0
    %434 = vmatmul.mubr.f32.gmra.mxu0 %v367
    %v435 = vpop.f32.mrf.mxu0
    %v436 = vadd.f32 0.0, %v435
    %v437 = vpop.f32.mrf.mxu0
    %438 = vdwg.mxu0
    %439 = vrot.lane.b32.xlu0 %v165, 64
    %v440 = vpop.permute.xlu0 %439
    %v443 = vsel %vm187, %v362, 0
    %445 = vmatprep.subr.mxu0 0.0
    %446 = vmatpush1.msra.mxu0 0.0
    %447 = vmatprep.subr.mxu0 0.0
    %448 = vmatpush1.msra.mxu0 0.0
    %449 = vmatprep.subr.mxu0 0.0
    %450 = vmatpush1.msra.mxu0 0.0
    %451 = vmatprep.subr.mxu0 0.0
    %452 = vmatpush1.msra.mxu0 0.0
    %453 = vmatprep.subr.mxu0 0.0
    %454 = vmatpush1.msra.mxu0 0.0
    %455 = vmatprep.subr.mxu0 0.0
    %456 = vmatpush1.msra.mxu0 0.0
    %457 = vmatprep.subr.mxu0 0.0
    %458 = vmatpush1.msra.mxu0 0.0
    %459 = vmatprep.subr.mxu0 0.0
    %460 = vmatpush1.msra.mxu0 0.0
    %461 = vmatprep.subr.mxu0 0.0
    %462 = vmatpush1.msra.mxu0 0.0
    %463 = vmatprep.subr.mxu0 0.0
    %464 = vmatpush1.msra.mxu0 0.0
    %465 = vmatprep.subr.mxu0 0.0
    %466 = vmatpush1.msra.mxu0 0.0
    %467 = vmatprep.subr.mxu0 0.0
    %468 = vmatpush1.msra.mxu0 0.0
    %469 = vmatprep.subr.mxu0 0.0
    %470 = vmatpush1.msra.mxu0 0.0
    %471 = vmatprep.subr.mxu0 0.0
    %472 = vmatpush1.msra.mxu0 0.0
    %473 = vmatprep.subr.mxu0 0.0
    %474 = vmatpush1.msra.mxu0 0.0
    %475 = vmatprep.subr.mxu0 0.0
    %476 = vmatpush1.msra.mxu0 %v440
    %477 = vmatprep.subr.mxu0 0.0
    %478 = vmatpush2.msra.mxu0 0.0
    %479 = vmatprep.subr.mxu0 0.0
    %480 = vmatpush2.msra.mxu0 0.0
    %481 = vmatprep.subr.mxu0 0.0
    %482 = vmatpush2.msra.mxu0 0.0
    %483 = vmatprep.subr.mxu0 0.0
    %484 = vmatpush2.msra.mxu0 0.0
    %485 = vmatprep.subr.mxu0 0.0
    %486 = vmatpush2.msra.mxu0 0.0
    %487 = vmatprep.subr.mxu0 0.0
    %488 = vmatpush2.msra.mxu0 0.0
    %489 = vmatprep.subr.mxu0 0.0
    %490 = vmatpush2.msra.mxu0 0.0
    %491 = vmatprep.subr.mxu0 0.0
    %492 = vmatpush2.msra.mxu0 0.0
    %493 = vmatprep.subr.mxu0 0.0
    %494 = vmatpush2.msra.mxu0 0.0
    %495 = vmatprep.subr.mxu0 0.0
    %496 = vmatpush2.msra.mxu0 0.0
    %497 = vmatprep.subr.mxu0 0.0
    %498 = vmatpush2.msra.mxu0 0.0
    %499 = vmatprep.subr.mxu0 0.0
    %500 = vmatpush2.msra.mxu0 0.0
    %501 = vmatprep.subr.mxu0 0.0
    %502 = vmatpush2.msra.mxu0 0.0
    %503 = vmatprep.subr.mxu0 0.0
    %504 = vmatpush2.msra.mxu0 0.0
    %505 = vmatprep.subr.mxu0 0.0
    %506 = vmatpush2.msra.mxu0 0.0
    %507 = vmatprep.subr.mxu0 0.0
    %508 = vmatpush2.msra.mxu0 0.0
    %509 = vmatprep.mubr.f32.mxu0 0.0
    %510 = vmatmul.mubr.f32.gmra.mxu0 %v443
    %v511 = vpop.f32.mrf.mxu0
    %v512 = vadd.f32 0.0, %v511
    %v513 = vpop.f32.mrf.mxu0
    %514 = vdwg.mxu0
    %515 = vst.msk [vmem:[#allocation2] sm:$0xff] %vm187, %v436
    %516 = vst.msk [vmem:[#allocation2 + $0x8] sm:$0xff] %vm187, %v512
    %517 = vrot.lane.b32.xlu0 %v160, 120
    %v518 = vpop.permute.xlu0 %517
    %519 = vrot.lane.b32.xlu0 %v160, 88
    %v520 = vpop.permute.xlu0 %519
    %v521 = vsel %vm187, %v518, 0
    %v523 = vsel %vm187, %v520, 0
    %525 = vmatprep.subr.mxu0 0.0
    %526 = vmatpush1.xpose.msra.mxu0 0.0
    %527 = vmatprep.subr.mxu0 0.0
    %528 = vmatpush1.xpose.msra.mxu0 0.0
    %529 = vmatprep.subr.mxu0 0.0
    %530 = vmatpush1.xpose.msra.mxu0 0.0
    %531 = vmatprep.subr.mxu0 0.0
    %532 = vmatpush1.xpose.msra.mxu0 0.0
    %533 = vmatprep.subr.mxu0 0.0
    %534 = vmatpush1.xpose.msra.mxu0 0.0
    %535 = vmatprep.subr.mxu0 0.0
    %536 = vmatpush1.xpose.msra.mxu0 0.0
    %537 = vmatprep.subr.mxu0 0.0
    %538 = vmatpush1.xpose.msra.mxu0 0.0
    %539 = vmatprep.subr.mxu0 0.0
    %540 = vmatpush1.xpose.msra.mxu0 0.0
    %541 = vmatprep.subr.mxu0 0.0
    %542 = vmatpush1.xpose.msra.mxu0 0.0
    %543 = vmatprep.subr.mxu0 0.0
    %544 = vmatpush1.xpose.msra.mxu0 0.0
    %545 = vmatprep.subr.mxu0 0.0
    %546 = vmatpush1.xpose.msra.mxu0 0.0
    %547 = vmatprep.subr.mxu0 0.0
    %548 = vmatpush1.xpose.msra.mxu0 0.0
    %549 = vmatprep.subr.mxu0 0.0
    %550 = vmatpush1.xpose.msra.mxu0 0.0
    %551 = vmatprep.subr.mxu0 0.0
    %552 = vmatpush1.xpose.msra.mxu0 0.0
    %553 = vmatprep.subr.mxu0 0.0
    %554 = vmatpush1.xpose.msra.mxu0 0.0
    %555 = vmatprep.subr.mxu0 0.0
    %556 = vmatpush1.xpose.msra.mxu0 %v523
    %557 = vmatprep.subr.mxu0 0.0
    %558 = vmatpush2.xpose.msra.mxu0 0.0
    %559 = vmatprep.subr.mxu0 0.0
    %560 = vmatpush2.xpose.msra.mxu0 0.0
    %561 = vmatprep.subr.mxu0 0.0
    %562 = vmatpush2.xpose.msra.mxu0 0.0
    %563 = vmatprep.subr.mxu0 0.0
    %564 = vmatpush2.xpose.msra.mxu0 0.0
    %565 = vmatprep.subr.mxu0 0.0
    %566 = vmatpush2.xpose.msra.mxu0 0.0
    %567 = vmatprep.subr.mxu0 0.0
    %568 = vmatpush2.xpose.msra.mxu0 0.0
    %569 = vmatprep.subr.mxu0 0.0
    %570 = vmatpush2.xpose.msra.mxu0 0.0
    %571 = vmatprep.subr.mxu0 0.0
    %572 = vmatpush2.xpose.msra.mxu0 0.0
    %573 = vmatprep.subr.mxu0 0.0
    %574 = vmatpush2.xpose.msra.mxu0 0.0
    %575 = vmatprep.subr.mxu0 0.0
    %576 = vmatpush2.xpose.msra.mxu0 0.0
    %577 = vmatprep.subr.mxu0 0.0
    %578 = vmatpush2.xpose.msra.mxu0 0.0
    %579 = vmatprep.subr.mxu0 0.0
    %580 = vmatpush2.xpose.msra.mxu0 0.0
    %581 = vmatprep.subr.mxu0 0.0
    %582 = vmatpush2.xpose.msra.mxu0 0.0
    %583 = vmatprep.subr.mxu0 0.0
    %584 = vmatpush2.xpose.msra.mxu0 0.0
    %585 = vmatprep.subr.mxu0 0.0
    %586 = vmatpush2.xpose.msra.mxu0 0.0
    %587 = vmatprep.subr.mxu0 0.0
    %588 = vmatpush2.xpose.msra.mxu0 0.0
    %589 = vmatprep.mubr.f32.mxu0 0.0
    %590 = vmatmul.mubr.f32.gmra.mxu0 %v521
    %v591 = vpop.f32.mrf.mxu0
    %v592 = vadd.f32 0.0, %v591
    %v593 = vpop.f32.mrf.mxu0
    %594 = vdwg.mxu0
    %595 = vrot.lane.b32.xlu0 %v165, 120
    %v596 = vpop.permute.xlu0 %595
    %597 = vrot.lane.b32.xlu0 %v165, 88
    %v598 = vpop.permute.xlu0 %597
    %v599 = vsel %vm187, %v596, 0
    %v601 = vsel %vm187, %v598, 0
    %603 = vmatprep.subr.mxu0 0.0
    %604 = vmatpush1.xpose.msra.mxu0 0.0
    %605 = vmatprep.subr.mxu0 0.0
    %606 = vmatpush1.xpose.msra.mxu0 0.0
    %607 = vmatprep.subr.mxu0 0.0
    %608 = vmatpush1.xpose.msra.mxu0 0.0
    %609 = vmatprep.subr.mxu0 0.0
    %610 = vmatpush1.xpose.msra.mxu0 0.0
    %611 = vmatprep.subr.mxu0 0.0
    %612 = vmatpush1.xpose.msra.mxu0 0.0
    %613 = vmatprep.subr.mxu0 0.0
    %614 = vmatpush1.xpose.msra.mxu0 0.0
    %615 = vmatprep.subr.mxu0 0.0
    %616 = vmatpush1.xpose.msra.mxu0 0.0
    %617 = vmatprep.subr.mxu0 0.0
    %618 = vmatpush1.xpose.msra.mxu0 0.0
    %619 = vmatprep.subr.mxu0 0.0
    %620 = vmatpush1.xpose.msra.mxu0 0.0
    %621 = vmatprep.subr.mxu0 0.0
    %622 = vmatpush1.xpose.msra.mxu0 0.0
    %623 = vmatprep.subr.mxu0 0.0
    %624 = vmatpush1.xpose.msra.mxu0 0.0
    %625 = vmatprep.subr.mxu0 0.0
    %626 = vmatpush1.xpose.msra.mxu0 0.0
    %627 = vmatprep.subr.mxu0 0.0
    %628 = vmatpush1.xpose.msra.mxu0 0.0
    %629 = vmatprep.subr.mxu0 0.0
    %630 = vmatpush1.xpose.msra.mxu0 0.0
    %631 = vmatprep.subr.mxu0 0.0
    %632 = vmatpush1.xpose.msra.mxu0 0.0
    %633 = vmatprep.subr.mxu0 0.0
    %634 = vmatpush1.xpose.msra.mxu0 %v601
    %635 = vmatprep.subr.mxu0 0.0
    %636 = vmatpush2.xpose.msra.mxu0 0.0
    %637 = vmatprep.subr.mxu0 0.0
    %638 = vmatpush2.xpose.msra.mxu0 0.0
    %639 = vmatprep.subr.mxu0 0.0
    %640 = vmatpush2.xpose.msra.mxu0 0.0
    %641 = vmatprep.subr.mxu0 0.0
    %642 = vmatpush2.xpose.msra.mxu0 0.0
    %643 = vmatprep.subr.mxu0 0.0
    %644 = vmatpush2.xpose.msra.mxu0 0.0
    %645 = vmatprep.subr.mxu0 0.0
    %646 = vmatpush2.xpose.msra.mxu0 0.0
    %647 = vmatprep.subr.mxu0 0.0
    %648 = vmatpush2.xpose.msra.mxu0 0.0
    %649 = vmatprep.subr.mxu0 0.0
    %650 = vmatpush2.xpose.msra.mxu0 0.0
    %651 = vmatprep.subr.mxu0 0.0
    %652 = vmatpush2.xpose.msra.mxu0 0.0
    %653 = vmatprep.subr.mxu0 0.0
    %654 = vmatpush2.xpose.msra.mxu0 0.0
    %655 = vmatprep.subr.mxu0 0.0
    %656 = vmatpush2.xpose.msra.mxu0 0.0
    %657 = vmatprep.subr.mxu0 0.0
    %658 = vmatpush2.xpose.msra.mxu0 0.0
    %659 = vmatprep.subr.mxu0 0.0
    %660 = vmatpush2.xpose.msra.mxu0 0.0
    %661 = vmatprep.subr.mxu0 0.0
    %662 = vmatpush2.xpose.msra.mxu0 0.0
    %663 = vmatprep.subr.mxu0 0.0
    %664 = vmatpush2.xpose.msra.mxu0 0.0
    %665 = vmatprep.subr.mxu0 0.0
    %666 = vmatpush2.xpose.msra.mxu0 0.0
    %667 = vmatprep.mubr.f32.mxu0 0.0
    %668 = vmatmul.mubr.f32.gmra.mxu0 %v599
    %v669 = vpop.f32.mrf.mxu0
    %v670 = vadd.f32 0.0, %v669
    %v671 = vpop.f32.mrf.mxu0
    %672 = vdwg.mxu0
    %v673 = vsel %vm182, -1e+09, %v592
    %v674 = vsel %vm183, -1e+09, %v670
    %v675 = vsel %vm187, %v673, -inf
    %676 = vmax.xlane.f32.xlu0 %v675
    %v677 = vpop.xlane.xlu0 %676
    %v678 = vsel %vm187, %v674, -inf
    %679 = vmax.xlane.f32.xlu0 %v678
    %v680 = vpop.xlane.xlu0 %679
    %v681 = vsub.f32 %v673, %v677
    %v682 = vsub.f32 %v674, %v680
    %v683 = vmul.f32 %v681, 1.442695
    %v684 = vpow.pop %v683
    %v685 = vmul.f32 %v682, 1.442695
    %v686 = vpow.pop %v685
    %v687 = vsel %vm187, %v684, 0.0
    %688 = vadd.xlane.f32.xlu0 %v687
    %v689 = vpop.xlane.xlu0 %688
    %v690 = vsel %vm187, %v686, 0.0
    %691 = vadd.xlane.f32.xlu0 %v690
    %v692 = vpop.xlane.xlu0 %691
    %v693 = vrcp.pop %v689
    %v694 = vmul.f32 %v684, %v693
    %v695 = vrcp.pop %v692
    %v696 = vmul.f32 %v686, %v695
    %697 = vrot.lane.b32.xlu0 %v160, 56
    %v698 = vpop.permute.xlu0 %697
    %v701 = vsel %vm187, %v694, 0
    %703 = vmatprep.subr.mxu0 0.0
    %704 = vmatpush1.msra.mxu0 0.0
    %705 = vmatprep.subr.mxu0 0.0
    %706 = vmatpush1.msra.mxu0 0.0
    %707 = vmatprep.subr.mxu0 0.0
    %708 = vmatpush1.msra.mxu0 0.0
    %709 = vmatprep.subr.mxu0 0.0
    %710 = vmatpush1.msra.mxu0 0.0
    %711 = vmatprep.subr.mxu0 0.0
    %712 = vmatpush1.msra.mxu0 0.0
    %713 = vmatprep.subr.mxu0 0.0
    %714 = vmatpush1.msra.mxu0 0.0
    %715 = vmatprep.subr.mxu0 0.0
    %716 = vmatpush1.msra.mxu0 0.0
    %717 = vmatprep.subr.mxu0 0.0
    %718 = vmatpush1.msra.mxu0 0.0
    %719 = vmatprep.subr.mxu0 0.0
    %720 = vmatpush1.msra.mxu0 0.0
    %721 = vmatprep.subr.mxu0 0.0
    %722 = vmatpush1.msra.mxu0 0.0
    %723 = vmatprep.subr.mxu0 0.0
    %724 = vmatpush1.msra.mxu0 0.0
    %725 = vmatprep.subr.mxu0 0.0
    %726 = vmatpush1.msra.mxu0 0.0
    %727 = vmatprep.subr.mxu0 0.0
    %728 = vmatpush1.msra.mxu0 0.0
    %729 = vmatprep.subr.mxu0 0.0
    %730 = vmatpush1.msra.mxu0 0.0
    %731 = vmatprep.subr.mxu0 0.0
    %732 = vmatpush1.msra.mxu0 0.0
    %733 = vmatprep.subr.mxu0 0.0
    %734 = vmatpush1.msra.mxu0 %v698
    %735 = vmatprep.subr.mxu0 0.0
    %736 = vmatpush2.msra.mxu0 0.0
    %737 = vmatprep.subr.mxu0 0.0
    %738 = vmatpush2.msra.mxu0 0.0
    %739 = vmatprep.subr.mxu0 0.0
    %740 = vmatpush2.msra.mxu0 0.0
    %741 = vmatprep.subr.mxu0 0.0
    %742 = vmatpush2.msra.mxu0 0.0
    %743 = vmatprep.subr.mxu0 0.0
    %744 = vmatpush2.msra.mxu0 0.0
    %745 = vmatprep.subr.mxu0 0.0
    %746 = vmatpush2.msra.mxu0 0.0
    %747 = vmatprep.subr.mxu0 0.0
    %748 = vmatpush2.msra.mxu0 0.0
    %749 = vmatprep.subr.mxu0 0.0
    %750 = vmatpush2.msra.mxu0 0.0
    %751 = vmatprep.subr.mxu0 0.0
    %752 = vmatpush2.msra.mxu0 0.0
    %753 = vmatprep.subr.mxu0 0.0
    %754 = vmatpush2.msra.mxu0 0.0
    %755 = vmatprep.subr.mxu0 0.0
    %756 = vmatpush2.msra.mxu0 0.0
    %757 = vmatprep.subr.mxu0 0.0
    %758 = vmatpush2.msra.mxu0 0.0
    %759 = vmatprep.subr.mxu0 0.0
    %760 = vmatpush2.msra.mxu0 0.0
    %761 = vmatprep.subr.mxu0 0.0
    %762 = vmatpush2.msra.mxu0 0.0
    %763 = vmatprep.subr.mxu0 0.0
    %764 = vmatpush2.msra.mxu0 0.0
    %765 = vmatprep.subr.mxu0 0.0
    %766 = vmatpush2.msra.mxu0 0.0
    %767 = vmatprep.mubr.f32.mxu0 0.0
    %768 = vmatmul.mubr.f32.gmra.mxu0 %v701
    %v769 = vpop.f32.mrf.mxu0
    %v770 = vadd.f32 0.0, %v769
    %v771 = vpop.f32.mrf.mxu0
    %772 = vdwg.mxu0
    %773 = vrot.lane.b32.xlu0 %v165, 56
    %v774 = vpop.permute.xlu0 %773
    %v777 = vsel %vm187, %v696, 0
    %779 = vmatprep.subr.mxu0 0.0
    %780 = vmatpush1.msra.mxu0 0.0
    %781 = vmatprep.subr.mxu0 0.0
    %782 = vmatpush1.msra.mxu0 0.0
    %783 = vmatprep.subr.mxu0 0.0
    %784 = vmatpush1.msra.mxu0 0.0
    %785 = vmatprep.subr.mxu0 0.0
    %786 = vmatpush1.msra.mxu0 0.0
    %787 = vmatprep.subr.mxu0 0.0
    %788 = vmatpush1.msra.mxu0 0.0
    %789 = vmatprep.subr.mxu0 0.0
    %790 = vmatpush1.msra.mxu0 0.0
    %791 = vmatprep.subr.mxu0 0.0
    %792 = vmatpush1.msra.mxu0 0.0
    %793 = vmatprep.subr.mxu0 0.0
    %794 = vmatpush1.msra.mxu0 0.0
    %795 = vmatprep.subr.mxu0 0.0
    %796 = vmatpush1.msra.mxu0 0.0
    %797 = vmatprep.subr.mxu0 0.0
    %798 = vmatpush1.msra.mxu0 0.0
    %799 = vmatprep.subr.mxu0 0.0
    %800 = vmatpush1.msra.mxu0 0.0
    %801 = vmatprep.subr.mxu0 0.0
    %802 = vmatpush1.msra.mxu0 0.0
    %803 = vmatprep.subr.mxu0 0.0
    %804 = vmatpush1.msra.mxu0 0.0
    %805 = vmatprep.subr.mxu0 0.0
    %806 = vmatpush1.msra.mxu0 0.0
    %807 = vmatprep.subr.mxu0 0.0
    %808 = vmatpush1.msra.mxu0 0.0
    %809 = vmatprep.subr.mxu0 0.0
    %810 = vmatpush1.msra.mxu0 %v774
    %811 = vmatprep.subr.mxu0 0.0
    %812 = vmatpush2.msra.mxu0 0.0
    %813 = vmatprep.subr.mxu0 0.0
    %814 = vmatpush2.msra.mxu0 0.0
    %815 = vmatprep.subr.mxu0 0.0
    %816 = vmatpush2.msra.mxu0 0.0
    %817 = vmatprep.subr.mxu0 0.0
    %818 = vmatpush2.msra.mxu0 0.0
    %819 = vmatprep.subr.mxu0 0.0
    %820 = vmatpush2.msra.mxu0 0.0
    %821 = vmatprep.subr.mxu0 0.0
    %822 = vmatpush2.msra.mxu0 0.0
    %823 = vmatprep.subr.mxu0 0.0
    %824 = vmatpush2.msra.mxu0 0.0
    %825 = vmatprep.subr.mxu0 0.0
    %826 = vmatpush2.msra.mxu0 0.0
    %827 = vmatprep.subr.mxu0 0.0
    %828 = vmatpush2.msra.mxu0 0.0
    %829 = vmatprep.subr.mxu0 0.0
    %830 = vmatpush2.msra.mxu0 0.0
    %831 = vmatprep.subr.mxu0 0.0
    %832 = vmatpush2.msra.mxu0 0.0
    %833 = vmatprep.subr.mxu0 0.0
    %834 = vmatpush2.msra.mxu0 0.0
    %835 = vmatprep.subr.mxu0 0.0
    %836 = vmatpush2.msra.mxu0 0.0
    %837 = vmatprep.subr.mxu0 0.0
    %838 = vmatpush2.msra.mxu0 0.0
    %839 = vmatprep.subr.mxu0 0.0
    %840 = vmatpush2.msra.mxu0 0.0
    %841 = vmatprep.subr.mxu0 0.0
    %842 = vmatpush2.msra.mxu0 0.0
    %843 = vmatprep.mubr.f32.mxu0 0.0
    %844 = vmatmul.mubr.f32.gmra.mxu0 %v777
    %v845 = vpop.f32.mrf.mxu0
    %v846 = vadd.f32 0.0, %v845
    %v847 = vpop.f32.mrf.mxu0
    %848 = vdwg.mxu0
    %851 = vrot.lane.b32.xlu0 %v770, 8
    %v852 = vpop.permute.xlu0 %851
    %853 = vrot.lane.b32.xlu0 %v846, 8
    %v854 = vpop.permute.xlu0 %853
    %vm857 = vcmask 130112
    %858 = vst.msk [vmem:[#allocation2] sm:$0xff] %vm857, %v852
    %859 = vst.msk [vmem:[#allocation2 + $0x8] sm:$0xff] %vm857, %v854
    %860 = vrot.lane.b32.xlu0 %v160, 112
    %v861 = vpop.permute.xlu0 %860
    %862 = vrot.lane.b32.xlu0 %v160, 80
    %v863 = vpop.permute.xlu0 %862
    %v864 = vsel %vm187, %v861, 0
    %v866 = vsel %vm187, %v863, 0
    %868 = vmatprep.subr.mxu0 0.0
    %869 = vmatpush1.xpose.msra.mxu0 0.0
    %870 = vmatprep.subr.mxu0 0.0
    %871 = vmatpush1.xpose.msra.mxu0 0.0
    %872 = vmatprep.subr.mxu0 0.0
    %873 = vmatpush1.xpose.msra.mxu0 0.0
    %874 = vmatprep.subr.mxu0 0.0
    %875 = vmatpush1.xpose.msra.mxu0 0.0
    %876 = vmatprep.subr.mxu0 0.0
    %877 = vmatpush1.xpose.msra.mxu0 0.0
    %878 = vmatprep.subr.mxu0 0.0
    %879 = vmatpush1.xpose.msra.mxu0 0.0
    %880 = vmatprep.subr.mxu0 0.0
    %881 = vmatpush1.xpose.msra.mxu0 0.0
    %882 = vmatprep.subr.mxu0 0.0
    %883 = vmatpush1.xpose.msra.mxu0 0.0
    %884 = vmatprep.subr.mxu0 0.0
    %885 = vmatpush1.xpose.msra.mxu0 0.0
    %886 = vmatprep.subr.mxu0 0.0
    %887 = vmatpush1.xpose.msra.mxu0 0.0
    %888 = vmatprep.subr.mxu0 0.0
    %889 = vmatpush1.xpose.msra.mxu0 0.0
    %890 = vmatprep.subr.mxu0 0.0
    %891 = vmatpush1.xpose.msra.mxu0 0.0
    %892 = vmatprep.subr.mxu0 0.0
    %893 = vmatpush1.xpose.msra.mxu0 0.0
    %894 = vmatprep.subr.mxu0 0.0
    %895 = vmatpush1.xpose.msra.mxu0 0.0
    %896 = vmatprep.subr.mxu0 0.0
    %897 = vmatpush1.xpose.msra.mxu0 0.0
    %898 = vmatprep.subr.mxu0 0.0
    %899 = vmatpush1.xpose.msra.mxu0 %v866
    %900 = vmatprep.subr.mxu0 0.0
    %901 = vmatpush2.xpose.msra.mxu0 0.0
    %902 = vmatprep.subr.mxu0 0.0
    %903 = vmatpush2.xpose.msra.mxu0 0.0
    %904 = vmatprep.subr.mxu0 0.0
    %905 = vmatpush2.xpose.msra.mxu0 0.0
    %906 = vmatprep.subr.mxu0 0.0
    %907 = vmatpush2.xpose.msra.mxu0 0.0
    %908 = vmatprep.subr.mxu0 0.0
    %909 = vmatpush2.xpose.msra.mxu0 0.0
    %910 = vmatprep.subr.mxu0 0.0
    %911 = vmatpush2.xpose.msra.mxu0 0.0
    %912 = vmatprep.subr.mxu0 0.0
    %913 = vmatpush2.xpose.msra.mxu0 0.0
    %914 = vmatprep.subr.mxu0 0.0
    %915 = vmatpush2.xpose.msra.mxu0 0.0
    %916 = vmatprep.subr.mxu0 0.0
    %917 = vmatpush2.xpose.msra.mxu0 0.0
    %918 = vmatprep.subr.mxu0 0.0
    %919 = vmatpush2.xpose.msra.mxu0 0.0
    %920 = vmatprep.subr.mxu0 0.0
    %921 = vmatpush2.xpose.msra.mxu0 0.0
    %922 = vmatprep.subr.mxu0 0.0
    %923 = vmatpush2.xpose.msra.mxu0 0.0
    %924 = vmatprep.subr.mxu0 0.0
    %925 = vmatpush2.xpose.msra.mxu0 0.0
    %926 = vmatprep.subr.mxu0 0.0
    %927 = vmatpush2.xpose.msra.mxu0 0.0
    %928 = vmatprep.subr.mxu0 0.0
    %929 = vmatpush2.xpose.msra.mxu0 0.0
    %930 = vmatprep.subr.mxu0 0.0
    %931 = vmatpush2.xpose.msra.mxu0 0.0
    %932 = vmatprep.mubr.f32.mxu0 0.0
    %933 = vmatmul.mubr.f32.gmra.mxu0 %v864
    %v934 = vpop.f32.mrf.mxu0
    %v935 = vadd.f32 0.0, %v934
    %v936 = vpop.f32.mrf.mxu0
    %937 = vdwg.mxu0
    %938 = vrot.lane.b32.xlu0 %v165, 112
    %v939 = vpop.permute.xlu0 %938
    %940 = vrot.lane.b32.xlu0 %v165, 80
    %v941 = vpop.permute.xlu0 %940
    %v942 = vsel %vm187, %v939, 0
    %v944 = vsel %vm187, %v941, 0
    %946 = vmatprep.subr.mxu0 0.0
    %947 = vmatpush1.xpose.msra.mxu0 0.0
    %948 = vmatprep.subr.mxu0 0.0
    %949 = vmatpush1.xpose.msra.mxu0 0.0
    %950 = vmatprep.subr.mxu0 0.0
    %951 = vmatpush1.xpose.msra.mxu0 0.0
    %952 = vmatprep.subr.mxu0 0.0
    %953 = vmatpush1.xpose.msra.mxu0 0.0
    %954 = vmatprep.subr.mxu0 0.0
    %955 = vmatpush1.xpose.msra.mxu0 0.0
    %956 = vmatprep.subr.mxu0 0.0
    %957 = vmatpush1.xpose.msra.mxu0 0.0
    %958 = vmatprep.subr.mxu0 0.0
    %959 = vmatpush1.xpose.msra.mxu0 0.0
    %960 = vmatprep.subr.mxu0 0.0
    %961 = vmatpush1.xpose.msra.mxu0 0.0
    %962 = vmatprep.subr.mxu0 0.0
    %963 = vmatpush1.xpose.msra.mxu0 0.0
    %964 = vmatprep.subr.mxu0 0.0
    %965 = vmatpush1.xpose.msra.mxu0 0.0
    %966 = vmatprep.subr.mxu0 0.0
    %967 = vmatpush1.xpose.msra.mxu0 0.0
    %968 = vmatprep.subr.mxu0 0.0
    %969 = vmatpush1.xpose.msra.mxu0 0.0
    %970 = vmatprep.subr.mxu0 0.0
    %971 = vmatpush1.xpose.msra.mxu0 0.0
    %972 = vmatprep.subr.mxu0 0.0
    %973 = vmatpush1.xpose.msra.mxu0 0.0
    %974 = vmatprep.subr.mxu0 0.0
    %975 = vmatpush1.xpose.msra.mxu0 0.0
    %976 = vmatprep.subr.mxu0 0.0
    %977 = vmatpush1.xpose.msra.mxu0 %v944
    %978 = vmatprep.subr.mxu0 0.0
    %979 = vmatpush2.xpose.msra.mxu0 0.0
    %980 = vmatprep.subr.mxu0 0.0
    %981 = vmatpush2.xpose.msra.mxu0 0.0
    %982 = vmatprep.subr.mxu0 0.0
    %983 = vmatpush2.xpose.msra.mxu0 0.0
    %984 = vmatprep.subr.mxu0 0.0
    %985 = vmatpush2.xpose.msra.mxu0 0.0
    %986 = vmatprep.subr.mxu0 0.0
    %987 = vmatpush2.xpose.msra.mxu0 0.0
    %988 = vmatprep.subr.mxu0 0.0
    %989 = vmatpush2.xpose.msra.mxu0 0.0
    %990 = vmatprep.subr.mxu0 0.0
    %991 = vmatpush2.xpose.msra.mxu0 0.0
    %992 = vmatprep.subr.mxu0 0.0
    %993 = vmatpush2.xpose.msra.mxu0 0.0
    %994 = vmatprep.subr.mxu0 0.0
    %995 = vmatpush2.xpose.msra.mxu0 0.0
    %996 = vmatprep.subr.mxu0 0.0
    %997 = vmatpush2.xpose.msra.mxu0 0.0
    %998 = vmatprep.subr.mxu0 0.0
    %999 = vmatpush2.xpose.msra.mxu0 0.0
    %1000 = vmatprep.subr.mxu0 0.0
    %1001 = vmatpush2.xpose.msra.mxu0 0.0
    %1002 = vmatprep.subr.mxu0 0.0
    %1003 = vmatpush2.xpose.msra.mxu0 0.0
    %1004 = vmatprep.subr.mxu0 0.0
    %1005 = vmatpush2.xpose.msra.mxu0 0.0
    %1006 = vmatprep.subr.mxu0 0.0
    %1007 = vmatpush2.xpose.msra.mxu0 0.0
    %1008 = vmatprep.subr.mxu0 0.0
    %1009 = vmatpush2.xpose.msra.mxu0 0.0
    %1010 = vmatprep.mubr.f32.mxu0 0.0
    %1011 = vmatmul.mubr.f32.gmra.mxu0 %v942
    %v1012 = vpop.f32.mrf.mxu0
    %v1013 = vadd.f32 0.0, %v1012
    %v1014 = vpop.f32.mrf.mxu0
    %1015 = vdwg.mxu0
    %v1016 = vsel %vm182, -1e+09, %v935
    %v1017 = vsel %vm183, -1e+09, %v1013
    %v1018 = vsel %vm187, %v1016, -inf
    %1019 = vmax.xlane.f32.xlu0 %v1018
    %v1020 = vpop.xlane.xlu0 %1019
    %v1021 = vsel %vm187, %v1017, -inf
    %1022 = vmax.xlane.f32.xlu0 %v1021
    %v1023 = vpop.xlane.xlu0 %1022
    %v1024 = vsub.f32 %v1016, %v1020
    %v1025 = vsub.f32 %v1017, %v1023
    %v1026 = vmul.f32 %v1024, 1.442695
    %v1027 = vpow.pop %v1026
    %v1028 = vmul.f32 %v1025, 1.442695
    %v1029 = vpow.pop %v1028
    %v1030 = vsel %vm187, %v1027, 0.0
    %1031 = vadd.xlane.f32.xlu0 %v1030
    %v1032 = vpop.xlane.xlu0 %1031
    %v1033 = vsel %vm187, %v1029, 0.0
    %1034 = vadd.xlane.f32.xlu0 %v1033
    %v1035 = vpop.xlane.xlu0 %1034
    %v1036 = vrcp.pop %v1032
    %v1037 = vmul.f32 %v1027, %v1036
    %v1038 = vrcp.pop %v1035
    %v1039 = vmul.f32 %v1029, %v1038
    %1040 = vrot.lane.b32.xlu0 %v160, 48
    %v1041 = vpop.permute.xlu0 %1040
    %v1044 = vsel %vm187, %v1037, 0
    %1046 = vmatprep.subr.mxu0 0.0
    %1047 = vmatpush1.msra.mxu0 0.0
    %1048 = vmatprep.subr.mxu0 0.0
    %1049 = vmatpush1.msra.mxu0 0.0
    %1050 = vmatprep.subr.mxu0 0.0
    %1051 = vmatpush1.msra.mxu0 0.0
    %1052 = vmatprep.subr.mxu0 0.0
    %1053 = vmatpush1.msra.mxu0 0.0
    %1054 = vmatprep.subr.mxu0 0.0
    %1055 = vmatpush1.msra.mxu0 0.0
    %1056 = vmatprep.subr.mxu0 0.0
    %1057 = vmatpush1.msra.mxu0 0.0
    %1058 = vmatprep.subr.mxu0 0.0
    %1059 = vmatpush1.msra.mxu0 0.0
    %1060 = vmatprep.subr.mxu0 0.0
    %1061 = vmatpush1.msra.mxu0 0.0
    %1062 = vmatprep.subr.mxu0 0.0
    %1063 = vmatpush1.msra.mxu0 0.0
    %1064 = vmatprep.subr.mxu0 0.0
    %1065 = vmatpush1.msra.mxu0 0.0
    %1066 = vmatprep.subr.mxu0 0.0
    %1067 = vmatpush1.msra.mxu0 0.0
    %1068 = vmatprep.subr.mxu0 0.0
    %1069 = vmatpush1.msra.mxu0 0.0
    %1070 = vmatprep.subr.mxu0 0.0
    %1071 = vmatpush1.msra.mxu0 0.0
    %1072 = vmatprep.subr.mxu0 0.0
    %1073 = vmatpush1.msra.mxu0 0.0
    %1074 = vmatprep.subr.mxu0 0.0
    %1075 = vmatpush1.msra.mxu0 0.0
    %1076 = vmatprep.subr.mxu0 0.0
    %1077 = vmatpush1.msra.mxu0 %v1041
    %1078 = vmatprep.subr.mxu0 0.0
    %1079 = vmatpush2.msra.mxu0 0.0
    %1080 = vmatprep.subr.mxu0 0.0
    %1081 = vmatpush2.msra.mxu0 0.0
    %1082 = vmatprep.subr.mxu0 0.0
    %1083 = vmatpush2.msra.mxu0 0.0
    %1084 = vmatprep.subr.mxu0 0.0
    %1085 = vmatpush2.msra.mxu0 0.0
    %1086 = vmatprep.subr.mxu0 0.0
    %1087 = vmatpush2.msra.mxu0 0.0
    %1088 = vmatprep.subr.mxu0 0.0
    %1089 = vmatpush2.msra.mxu0 0.0
    %1090 = vmatprep.subr.mxu0 0.0
    %1091 = vmatpush2.msra.mxu0 0.0
    %1092 = vmatprep.subr.mxu0 0.0
    %1093 = vmatpush2.msra.mxu0 0.0
    %1094 = vmatprep.subr.mxu0 0.0
    %1095 = vmatpush2.msra.mxu0 0.0
    %1096 = vmatprep.subr.mxu0 0.0
    %1097 = vmatpush2.msra.mxu0 0.0
    %1098 = vmatprep.subr.mxu0 0.0
    %1099 = vmatpush2.msra.mxu0 0.0
    %1100 = vmatprep.subr.mxu0 0.0
    %1101 = vmatpush2.msra.mxu0 0.0
    %1102 = vmatprep.subr.mxu0 0.0
    %1103 = vmatpush2.msra.mxu0 0.0
    %1104 = vmatprep.subr.mxu0 0.0
    %1105 = vmatpush2.msra.mxu0 0.0
    %1106 = vmatprep.subr.mxu0 0.0
    %1107 = vmatpush2.msra.mxu0 0.0
    %1108 = vmatprep.subr.mxu0 0.0
    %1109 = vmatpush2.msra.mxu0 0.0
    %1110 = vmatprep.mubr.f32.mxu0 0.0
    %1111 = vmatmul.mubr.f32.gmra.mxu0 %v1044
    %v1112 = vpop.f32.mrf.mxu0
    %v1113 = vadd.f32 0.0, %v1112
    %v1114 = vpop.f32.mrf.mxu0
    %1115 = vdwg.mxu0
    %1116 = vrot.lane.b32.xlu0 %v165, 48
    %v1117 = vpop.permute.xlu0 %1116
    %v1120 = vsel %vm187, %v1039, 0
    %1122 = vmatprep.subr.mxu0 0.0
    %1123 = vmatpush1.msra.mxu0 0.0
    %1124 = vmatprep.subr.mxu0 0.0
    %1125 = vmatpush1.msra.mxu0 0.0
    %1126 = vmatprep.subr.mxu0 0.0
    %1127 = vmatpush1.msra.mxu0 0.0
    %1128 = vmatprep.subr.mxu0 0.0
    %1129 = vmatpush1.msra.mxu0 0.0
    %1130 = vmatprep.subr.mxu0 0.0
    %1131 = vmatpush1.msra.mxu0 0.0
    %1132 = vmatprep.subr.mxu0 0.0
    %1133 = vmatpush1.msra.mxu0 0.0
    %1134 = vmatprep.subr.mxu0 0.0
    %1135 = vmatpush1.msra.mxu0 0.0
    %1136 = vmatprep.subr.mxu0 0.0
    %1137 = vmatpush1.msra.mxu0 0.0
    %1138 = vmatprep.subr.mxu0 0.0
    %1139 = vmatpush1.msra.mxu0 0.0
    %1140 = vmatprep.subr.mxu0 0.0
    %1141 = vmatpush1.msra.mxu0 0.0
    %1142 = vmatprep.subr.mxu0 0.0
    %1143 = vmatpush1.msra.mxu0 0.0
    %1144 = vmatprep.subr.mxu0 0.0
    %1145 = vmatpush1.msra.mxu0 0.0
    %1146 = vmatprep.subr.mxu0 0.0
    %1147 = vmatpush1.msra.mxu0 0.0
    %1148 = vmatprep.subr.mxu0 0.0
    %1149 = vmatpush1.msra.mxu0 0.0
    %1150 = vmatprep.subr.mxu0 0.0
    %1151 = vmatpush1.msra.mxu0 0.0
    %1152 = vmatprep.subr.mxu0 0.0
    %1153 = vmatpush1.msra.mxu0 %v1117
    %1154 = vmatprep.subr.mxu0 0.0
    %1155 = vmatpush2.msra.mxu0 0.0
    %1156 = vmatprep.subr.mxu0 0.0
    %1157 = vmatpush2.msra.mxu0 0.0
    %1158 = vmatprep.subr.mxu0 0.0
    %1159 = vmatpush2.msra.mxu0 0.0
    %1160 = vmatprep.subr.mxu0 0.0
    %1161 = vmatpush2.msra.mxu0 0.0
    %1162 = vmatprep.subr.mxu0 0.0
    %1163 = vmatpush2.msra.mxu0 0.0
    %1164 = vmatprep.subr.mxu0 0.0
    %1165 = vmatpush2.msra.mxu0 0.0
    %1166 = vmatprep.subr.mxu0 0.0
    %1167 = vmatpush2.msra.mxu0 0.0
    %1168 = vmatprep.subr.mxu0 0.0
    %1169 = vmatpush2.msra.mxu0 0.0
    %1170 = vmatprep.subr.mxu0 0.0
    %1171 = vmatpush2.msra.mxu0 0.0
    %1172 = vmatprep.subr.mxu0 0.0
    %1173 = vmatpush2.msra.mxu0 0.0
    %1174 = vmatprep.subr.mxu0 0.0
    %1175 = vmatpush2.msra.mxu0 0.0
    %1176 = vmatprep.subr.mxu0 0.0
    %1177 = vmatpush2.msra.mxu0 0.0
    %1178 = vmatprep.subr.mxu0 0.0
    %1179 = vmatpush2.msra.mxu0 0.0
    %1180 = vmatprep.subr.mxu0 0.0
    %1181 = vmatpush2.msra.mxu0 0.0
    %1182 = vmatprep.subr.mxu0 0.0
    %1183 = vmatpush2.msra.mxu0 0.0
    %1184 = vmatprep.subr.mxu0 0.0
    %1185 = vmatpush2.msra.mxu0 0.0
    %1186 = vmatprep.mubr.f32.mxu0 0.0
    %1187 = vmatmul.mubr.f32.gmra.mxu0 %v1120
    %v1188 = vpop.f32.mrf.mxu0
    %v1189 = vadd.f32 0.0, %v1188
    %v1190 = vpop.f32.mrf.mxu0
    %1191 = vdwg.mxu0
    %1194 = vrot.lane.b32.xlu0 %v1113, 16
    %v1195 = vpop.permute.xlu0 %1194
    %1196 = vrot.lane.b32.xlu0 %v1189, 16
    %v1197 = vpop.permute.xlu0 %1196
    %vm1200 = vcmask 195712
    %1201 = vst.msk [vmem:[#allocation2] sm:$0xff] %vm1200, %v1195
    %1202 = vst.msk [vmem:[#allocation2 + $0x8] sm:$0xff] %vm1200, %v1197
    %1203 = vrot.lane.b32.xlu0 %v160, 104
    %v1204 = vpop.permute.xlu0 %1203
    %1205 = vrot.lane.b32.xlu0 %v160, 72
    %v1206 = vpop.permute.xlu0 %1205
    %v1207 = vsel %vm187, %v1204, 0
    %v1209 = vsel %vm187, %v1206, 0
    %1211 = vmatprep.subr.mxu0 0.0
    %1212 = vmatpush1.xpose.msra.mxu0 0.0
    %1213 = vmatprep.subr.mxu0 0.0
    %1214 = vmatpush1.xpose.msra.mxu0 0.0
    %1215 = vmatprep.subr.mxu0 0.0
    %1216 = vmatpush1.xpose.msra.mxu0 0.0
    %1217 = vmatprep.subr.mxu0 0.0
    %1218 = vmatpush1.xpose.msra.mxu0 0.0
    %1219 = vmatprep.subr.mxu0 0.0
    %1220 = vmatpush1.xpose.msra.mxu0 0.0
    %1221 = vmatprep.subr.mxu0 0.0
    %1222 = vmatpush1.xpose.msra.mxu0 0.0
    %1223 = vmatprep.subr.mxu0 0.0
    %1224 = vmatpush1.xpose.msra.mxu0 0.0
    %1225 = vmatprep.subr.mxu0 0.0
    %1226 = vmatpush1.xpose.msra.mxu0 0.0
    %1227 = vmatprep.subr.mxu0 0.0
    %1228 = vmatpush1.xpose.msra.mxu0 0.0
    %1229 = vmatprep.subr.mxu0 0.0
    %1230 = vmatpush1.xpose.msra.mxu0 0.0
    %1231 = vmatprep.subr.mxu0 0.0
    %1232 = vmatpush1.xpose.msra.mxu0 0.0
    %1233 = vmatprep.subr.mxu0 0.0
    %1234 = vmatpush1.xpose.msra.mxu0 0.0
    %1235 = vmatprep.subr.mxu0 0.0
    %1236 = vmatpush1.xpose.msra.mxu0 0.0
    %1237 = vmatprep.subr.mxu0 0.0
    %1238 = vmatpush1.xpose.msra.mxu0 0.0
    %1239 = vmatprep.subr.mxu0 0.0
    %1240 = vmatpush1.xpose.msra.mxu0 0.0
    %1241 = vmatprep.subr.mxu0 0.0
    %1242 = vmatpush1.xpose.msra.mxu0 %v1209
    %1243 = vmatprep.subr.mxu0 0.0
    %1244 = vmatpush2.xpose.msra.mxu0 0.0
    %1245 = vmatprep.subr.mxu0 0.0
    %1246 = vmatpush2.xpose.msra.mxu0 0.0
    %1247 = vmatprep.subr.mxu0 0.0
    %1248 = vmatpush2.xpose.msra.mxu0 0.0
    %1249 = vmatprep.subr.mxu0 0.0
    %1250 = vmatpush2.xpose.msra.mxu0 0.0
    %1251 = vmatprep.subr.mxu0 0.0
    %1252 = vmatpush2.xpose.msra.mxu0 0.0
    %1253 = vmatprep.subr.mxu0 0.0
    %1254 = vmatpush2.xpose.msra.mxu0 0.0
    %1255 = vmatprep.subr.mxu0 0.0
    %1256 = vmatpush2.xpose.msra.mxu0 0.0
    %1257 = vmatprep.subr.mxu0 0.0
    %1258 = vmatpush2.xpose.msra.mxu0 0.0
    %1259 = vmatprep.subr.mxu0 0.0
    %1260 = vmatpush2.xpose.msra.mxu0 0.0
    %1261 = vmatprep.subr.mxu0 0.0
    %1262 = vmatpush2.xpose.msra.mxu0 0.0
    %1263 = vmatprep.subr.mxu0 0.0
    %1264 = vmatpush2.xpose.msra.mxu0 0.0
    %1265 = vmatprep.subr.mxu0 0.0
    %1266 = vmatpush2.xpose.msra.mxu0 0.0
    %1267 = vmatprep.subr.mxu0 0.0
    %1268 = vmatpush2.xpose.msra.mxu0 0.0
    %1269 = vmatprep.subr.mxu0 0.0
    %1270 = vmatpush2.xpose.msra.mxu0 0.0
    %1271 = vmatprep.subr.mxu0 0.0
    %1272 = vmatpush2.xpose.msra.mxu0 0.0
    %1273 = vmatprep.subr.mxu0 0.0
    %1274 = vmatpush2.xpose.msra.mxu0 0.0
    %1275 = vmatprep.mubr.f32.mxu0 0.0
    %1276 = vmatmul.mubr.f32.gmra.mxu0 %v1207
    %v1277 = vpop.f32.mrf.mxu0
    %v1278 = vadd.f32 0.0, %v1277
    %v1279 = vpop.f32.mrf.mxu0
    %1280 = vdwg.mxu0
    %1281 = vrot.lane.b32.xlu0 %v165, 104
    %v1282 = vpop.permute.xlu0 %1281
    %1283 = vrot.lane.b32.xlu0 %v165, 72
    %v1284 = vpop.permute.xlu0 %1283
    %v1285 = vsel %vm187, %v1282, 0
    %v1287 = vsel %vm187, %v1284, 0
    %1289 = vmatprep.subr.mxu0 0.0
    %1290 = vmatpush1.xpose.msra.mxu0 0.0
    %1291 = vmatprep.subr.mxu0 0.0
    %1292 = vmatpush1.xpose.msra.mxu0 0.0
    %1293 = vmatprep.subr.mxu0 0.0
    %1294 = vmatpush1.xpose.msra.mxu0 0.0
    %1295 = vmatprep.subr.mxu0 0.0
    %1296 = vmatpush1.xpose.msra.mxu0 0.0
    %1297 = vmatprep.subr.mxu0 0.0
    %1298 = vmatpush1.xpose.msra.mxu0 0.0
    %1299 = vmatprep.subr.mxu0 0.0
    %1300 = vmatpush1.xpose.msra.mxu0 0.0
    %1301 = vmatprep.subr.mxu0 0.0
    %1302 = vmatpush1.xpose.msra.mxu0 0.0
    %1303 = vmatprep.subr.mxu0 0.0
    %1304 = vmatpush1.xpose.msra.mxu0 0.0
    %1305 = vmatprep.subr.mxu0 0.0
    %1306 = vmatpush1.xpose.msra.mxu0 0.0
    %1307 = vmatprep.subr.mxu0 0.0
    %1308 = vmatpush1.xpose.msra.mxu0 0.0
    %1309 = vmatprep.subr.mxu0 0.0
    %1310 = vmatpush1.xpose.msra.mxu0 0.0
    %1311 = vmatprep.subr.mxu0 0.0
    %1312 = vmatpush1.xpose.msra.mxu0 0.0
    %1313 = vmatprep.subr.mxu0 0.0
    %1314 = vmatpush1.xpose.msra.mxu0 0.0
    %1315 = vmatprep.subr.mxu0 0.0
    %1316 = vmatpush1.xpose.msra.mxu0 0.0
    %1317 = vmatprep.subr.mxu0 0.0
    %1318 = vmatpush1.xpose.msra.mxu0 0.0
    %1319 = vmatprep.subr.mxu0 0.0
    %1320 = vmatpush1.xpose.msra.mxu0 %v1287
    %1321 = vmatprep.subr.mxu0 0.0
    %1322 = vmatpush2.xpose.msra.mxu0 0.0
    %1323 = vmatprep.subr.mxu0 0.0
    %1324 = vmatpush2.xpose.msra.mxu0 0.0
    %1325 = vmatprep.subr.mxu0 0.0
    %1326 = vmatpush2.xpose.msra.mxu0 0.0
    %1327 = vmatprep.subr.mxu0 0.0
    %1328 = vmatpush2.xpose.msra.mxu0 0.0
    %1329 = vmatprep.subr.mxu0 0.0
    %1330 = vmatpush2.xpose.msra.mxu0 0.0
    %1331 = vmatprep.subr.mxu0 0.0
    %1332 = vmatpush2.xpose.msra.mxu0 0.0
    %1333 = vmatprep.subr.mxu0 0.0
    %1334 = vmatpush2.xpose.msra.mxu0 0.0
    %1335 = vmatprep.subr.mxu0 0.0
    %1336 = vmatpush2.xpose.msra.mxu0 0.0
    %1337 = vmatprep.subr.mxu0 0.0
    %1338 = vmatpush2.xpose.msra.mxu0 0.0
    %1339 = vmatprep.subr.mxu0 0.0
    %1340 = vmatpush2.xpose.msra.mxu0 0.0
    %1341 = vmatprep.subr.mxu0 0.0
    %1342 = vmatpush2.xpose.msra.mxu0 0.0
    %1343 = vmatprep.subr.mxu0 0.0
    %1344 = vmatpush2.xpose.msra.mxu0 0.0
    %1345 = vmatprep.subr.mxu0 0.0
    %1346 = vmatpush2.xpose.msra.mxu0 0.0
    %1347 = vmatprep.subr.mxu0 0.0
    %1348 = vmatpush2.xpose.msra.mxu0 0.0
    %1349 = vmatprep.subr.mxu0 0.0
    %1350 = vmatpush2.xpose.msra.mxu0 0.0
    %1351 = vmatprep.subr.mxu0 0.0
    %1352 = vmatpush2.xpose.msra.mxu0 0.0
    %1353 = vmatprep.mubr.f32.mxu0 0.0
    %1354 = vmatmul.mubr.f32.gmra.mxu0 %v1285
    %v1355 = vpop.f32.mrf.mxu0
    %v1356 = vadd.f32 0.0, %v1355
    %v1357 = vpop.f32.mrf.mxu0
    %1358 = vdwg.mxu0
    %v1359 = vsel %vm182, -1e+09, %v1278
    %v1360 = vsel %vm183, -1e+09, %v1356
    %v1361 = vsel %vm187, %v1359, -inf
    %1362 = vmax.xlane.f32.xlu0 %v1361
    %v1363 = vpop.xlane.xlu0 %1362
    %v1364 = vsel %vm187, %v1360, -inf
    %1365 = vmax.xlane.f32.xlu0 %v1364
    %v1366 = vpop.xlane.xlu0 %1365
    %v1367 = vsub.f32 %v1359, %v1363
    %v1368 = vsub.f32 %v1360, %v1366
    %v1369 = vmul.f32 %v1367, 1.442695
    %v1370 = vpow.pop %v1369
    %v1371 = vmul.f32 %v1368, 1.442695
    %v1372 = vpow.pop %v1371
    %v1373 = vsel %vm187, %v1370, 0.0
    %1374 = vadd.xlane.f32.xlu0 %v1373
    %v1375 = vpop.xlane.xlu0 %1374
    %v1376 = vsel %vm187, %v1372, 0.0
    %1377 = vadd.xlane.f32.xlu0 %v1376
    %v1378 = vpop.xlane.xlu0 %1377
    %v1379 = vrcp.pop %v1375
    %v1380 = vmul.f32 %v1370, %v1379
    %v1381 = vrcp.pop %v1378
    %v1382 = vmul.f32 %v1372, %v1381
    %1383 = vrot.lane.b32.xlu0 %v160, 40
    %v1384 = vpop.permute.xlu0 %1383
    %v1387 = vsel %vm187, %v1380, 0
    %1389 = vmatprep.subr.mxu0 0.0
    %1390 = vmatpush1.msra.mxu0 0.0
    %1391 = vmatprep.subr.mxu0 0.0
    %1392 = vmatpush1.msra.mxu0 0.0
    %1393 = vmatprep.subr.mxu0 0.0
    %1394 = vmatpush1.msra.mxu0 0.0
    %1395 = vmatprep.subr.mxu0 0.0
    %1396 = vmatpush1.msra.mxu0 0.0
    %1397 = vmatprep.subr.mxu0 0.0
    %1398 = vmatpush1.msra.mxu0 0.0
    %1399 = vmatprep.subr.mxu0 0.0
    %1400 = vmatpush1.msra.mxu0 0.0
    %1401 = vmatprep.subr.mxu0 0.0
    %1402 = vmatpush1.msra.mxu0 0.0
    %1403 = vmatprep.subr.mxu0 0.0
    %1404 = vmatpush1.msra.mxu0 0.0
    %1405 = vmatprep.subr.mxu0 0.0
    %1406 = vmatpush1.msra.mxu0 0.0
    %1407 = vmatprep.subr.mxu0 0.0
    %1408 = vmatpush1.msra.mxu0 0.0
    %1409 = vmatprep.subr.mxu0 0.0
    %1410 = vmatpush1.msra.mxu0 0.0
    %1411 = vmatprep.subr.mxu0 0.0
    %1412 = vmatpush1.msra.mxu0 0.0
    %1413 = vmatprep.subr.mxu0 0.0
    %1414 = vmatpush1.msra.mxu0 0.0
    %1415 = vmatprep.subr.mxu0 0.0
    %1416 = vmatpush1.msra.mxu0 0.0
    %1417 = vmatprep.subr.mxu0 0.0
    %1418 = vmatpush1.msra.mxu0 0.0
    %1419 = vmatprep.subr.mxu0 0.0
    %1420 = vmatpush1.msra.mxu0 %v1384
    %1421 = vmatprep.subr.mxu0 0.0
    %1422 = vmatpush2.msra.mxu0 0.0
    %1423 = vmatprep.subr.mxu0 0.0
    %1424 = vmatpush2.msra.mxu0 0.0
    %1425 = vmatprep.subr.mxu0 0.0
    %1426 = vmatpush2.msra.mxu0 0.0
    %1427 = vmatprep.subr.mxu0 0.0
    %1428 = vmatpush2.msra.mxu0 0.0
    %1429 = vmatprep.subr.mxu0 0.0
    %1430 = vmatpush2.msra.mxu0 0.0
    %1431 = vmatprep.subr.mxu0 0.0
    %1432 = vmatpush2.msra.mxu0 0.0
    %1433 = vmatprep.subr.mxu0 0.0
    %1434 = vmatpush2.msra.mxu0 0.0
    %1435 = vmatprep.subr.mxu0 0.0
    %1436 = vmatpush2.msra.mxu0 0.0
    %1437 = vmatprep.subr.mxu0 0.0
    %1438 = vmatpush2.msra.mxu0 0.0
    %1439 = vmatprep.subr.mxu0 0.0
    %1440 = vmatpush2.msra.mxu0 0.0
    %1441 = vmatprep.subr.mxu0 0.0
    %1442 = vmatpush2.msra.mxu0 0.0
    %1443 = vmatprep.subr.mxu0 0.0
    %1444 = vmatpush2.msra.mxu0 0.0
    %1445 = vmatprep.subr.mxu0 0.0
    %1446 = vmatpush2.msra.mxu0 0.0
    %1447 = vmatprep.subr.mxu0 0.0
    %1448 = vmatpush2.msra.mxu0 0.0
    %1449 = vmatprep.subr.mxu0 0.0
    %1450 = vmatpush2.msra.mxu0 0.0
    %1451 = vmatprep.subr.mxu0 0.0
    %1452 = vmatpush2.msra.mxu0 0.0
    %1453 = vmatprep.mubr.f32.mxu0 0.0
    %1454 = vmatmul.mubr.f32.gmra.mxu0 %v1387
    %v1455 = vpop.f32.mrf.mxu0
    %v1456 = vadd.f32 0.0, %v1455
    %v1457 = vpop.f32.mrf.mxu0
    %1458 = vdwg.mxu0
    %1459 = vrot.lane.b32.xlu0 %v165, 40
    %v1460 = vpop.permute.xlu0 %1459
    %v1463 = vsel %vm187, %v1382, 0
    %1465 = vmatprep.subr.mxu0 0.0
    %1466 = vmatpush1.msra.mxu0 0.0
    %1467 = vmatprep.subr.mxu0 0.0
    %1468 = vmatpush1.msra.mxu0 0.0
    %1469 = vmatprep.subr.mxu0 0.0
    %1470 = vmatpush1.msra.mxu0 0.0
    %1471 = vmatprep.subr.mxu0 0.0
    %1472 = vmatpush1.msra.mxu0 0.0
    %1473 = vmatprep.subr.mxu0 0.0
    %1474 = vmatpush1.msra.mxu0 0.0
    %1475 = vmatprep.subr.mxu0 0.0
    %1476 = vmatpush1.msra.mxu0 0.0
    %1477 = vmatprep.subr.mxu0 0.0
    %1478 = vmatpush1.msra.mxu0 0.0
    %1479 = vmatprep.subr.mxu0 0.0
    %1480 = vmatpush1.msra.mxu0 0.0
    %1481 = vmatprep.subr.mxu0 0.0
    %1482 = vmatpush1.msra.mxu0 0.0
    %1483 = vmatprep.subr.mxu0 0.0
    %1484 = vmatpush1.msra.mxu0 0.0
    %1485 = vmatprep.subr.mxu0 0.0
    %1486 = vmatpush1.msra.mxu0 0.0
    %1487 = vmatprep.subr.mxu0 0.0
    %1488 = vmatpush1.msra.mxu0 0.0
    %1489 = vmatprep.subr.mxu0 0.0
    %1490 = vmatpush1.msra.mxu0 0.0
    %1491 = vmatprep.subr.mxu0 0.0
    %1492 = vmatpush1.msra.mxu0 0.0
    %1493 = vmatprep.subr.mxu0 0.0
    %1494 = vmatpush1.msra.mxu0 0.0
    %1495 = vmatprep.subr.mxu0 0.0
    %1496 = vmatpush1.msra.mxu0 %v1460
    %1497 = vmatprep.subr.mxu0 0.0
    %1498 = vmatpush2.msra.mxu0 0.0
    %1499 = vmatprep.subr.mxu0 0.0
    %1500 = vmatpush2.msra.mxu0 0.0
    %1501 = vmatprep.subr.mxu0 0.0
    %1502 = vmatpush2.msra.mxu0 0.0
    %1503 = vmatprep.subr.mxu0 0.0
    %1504 = vmatpush2.msra.mxu0 0.0
    %1505 = vmatprep.subr.mxu0 0.0
    %1506 = vmatpush2.msra.mxu0 0.0
    %1507 = vmatprep.subr.mxu0 0.0
    %1508 = vmatpush2.msra.mxu0 0.0
    %1509 = vmatprep.subr.mxu0 0.0
    %1510 = vmatpush2.msra.mxu0 0.0
    %1511 = vmatprep.subr.mxu0 0.0
    %1512 = vmatpush2.msra.mxu0 0.0
    %1513 = vmatprep.subr.mxu0 0.0
    %1514 = vmatpush2.msra.mxu0 0.0
    %1515 = vmatprep.subr.mxu0 0.0
    %1516 = vmatpush2.msra.mxu0 0.0
    %1517 = vmatprep.subr.mxu0 0.0
    %1518 = vmatpush2.msra.mxu0 0.0
    %1519 = vmatprep.subr.mxu0 0.0
    %1520 = vmatpush2.msra.mxu0 0.0
    %1521 = vmatprep.subr.mxu0 0.0
    %1522 = vmatpush2.msra.mxu0 0.0
    %1523 = vmatprep.subr.mxu0 0.0
    %1524 = vmatpush2.msra.mxu0 0.0
    %1525 = vmatprep.subr.mxu0 0.0
    %1526 = vmatpush2.msra.mxu0 0.0
    %1527 = vmatprep.subr.mxu0 0.0
    %1528 = vmatpush2.msra.mxu0 0.0
    %1529 = vmatprep.mubr.f32.mxu0 0.0
    %1530 = vmatmul.mubr.f32.gmra.mxu0 %v1463
    %v1531 = vpop.f32.mrf.mxu0
    %v1532 = vadd.f32 0.0, %v1531
    %v1533 = vpop.f32.mrf.mxu0
    %1534 = vdwg.mxu0
    %1537 = vrot.lane.b32.xlu0 %v1456, 24
    %v1538 = vpop.permute.xlu0 %1537
    %1539 = vrot.lane.b32.xlu0 %v1532, 24
    %v1540 = vpop.permute.xlu0 %1539
    %vm1543 = vcmask 261312
    %1544 = vst.msk [vmem:[#allocation2] sm:$0xff] %vm1543, %v1538
    %1545 = vst.msk [vmem:[#allocation2 + $0x8] sm:$0xff] %vm1543, %v1540
    %1546 = vst.msk [vmem:[#allocation9] sm:$0xff] %vm187, %v360
    %1547 = vst.msk [vmem:[#allocation9 + $0x8] sm:$0xff] %vm187, %v694
    %1548 = vst.msk [vmem:[#allocation9 + $0x10] sm:$0xff] %vm187, %v1037
    %1549 = vst.msk [vmem:[#allocation9 + $0x18] sm:$0xff] %vm187, %v1380
    %1550 = vst.msk [vmem:[#allocation9 + $0x20] sm:$0xff] %vm187, %v362
    %1551 = vst.msk [vmem:[#allocation9 + $0x28] sm:$0xff] %vm187, %v696
    %1552 = vst.msk [vmem:[#allocation9 + $0x30] sm:$0xff] %vm187, %v1039
    %1553 = vst.msk [vmem:[#allocation9 + $0x38] sm:$0xff] %vm187, %v1382
    %v1554 = vld [vmem:[#allocation2] sm:$0xff]
    %v1555 = vld [vmem:[#allocation2 + $0x8] sm:$0xff]
    %v1556 = vld [vmem:[%s4] sm:$0xff]
    %v1557 = vld [vmem:[%s4 + $0x8] sm:$0xff]
    %v1558 = vld [vmem:[%s4 + $0x10] sm:$0xff]
    %v1559 = vld [vmem:[%s4 + $0x18] sm:$0xff]
    %v1560 = vld [vmem:[%s5] sm:$0x1]
    %v1562 = vlaneseq
    %v1563 = vshrl.u32 %v1562, 7
    %v1564 = vsub.s32 0, %v1563
    %v1565 = vrot.slane %v1560, %v1564
    %v1568 = vsel %vm86, %v1554, 0
    %v1571 = vsel %vm86, %v1555, 0
    %1573 = vmatprep.subr.mxu0 0.0
    %1574 = vmatpush1.msra.mxu0 0.0
    %1575 = vmatprep.subr.mxu0 0.0
    %1576 = vmatpush1.msra.mxu0 0.0
    %1577 = vmatprep.subr.mxu0 0.0
    %1578 = vmatpush1.msra.mxu0 0.0
    %1579 = vmatprep.subr.mxu0 0.0
    %1580 = vmatpush1.msra.mxu0 0.0
    %1581 = vmatprep.subr.mxu0 0.0
    %1582 = vmatpush1.msra.mxu0 0.0
    %1583 = vmatprep.subr.mxu0 0.0
    %1584 = vmatpush1.msra.mxu0 0.0
    %1585 = vmatprep.subr.mxu0 0.0
    %1586 = vmatpush1.msra.mxu0 0.0
    %1587 = vmatprep.subr.mxu0 0.0
    %1588 = vmatpush1.msra.mxu0 0.0
    %1589 = vmatprep.subr.mxu0 0.0
    %1590 = vmatpush1.msra.mxu0 0.0
    %1591 = vmatprep.subr.mxu0 0.0
    %1592 = vmatpush1.msra.mxu0 0.0
    %1593 = vmatprep.subr.mxu0 0.0
    %1594 = vmatpush1.msra.mxu0 0.0
    %1595 = vmatprep.subr.mxu0 0.0
    %1596 = vmatpush1.msra.mxu0 0.0
    %1597 = vmatprep.subr.mxu0 0.0
    %1598 = vmatpush1.msra.mxu0 %v1559
    %1599 = vmatprep.subr.mxu0 0.0
    %1600 = vmatpush1.msra.mxu0 %v1558
    %1601 = vmatprep.subr.mxu0 0.0
    %1602 = vmatpush1.msra.mxu0 %v1557
    %1603 = vmatprep.subr.mxu0 0.0
    %1604 = vmatpush1.msra.mxu0 %v1556
    %1605 = vmatprep.subr.mxu0 0.0
    %1606 = vmatpush2.msra.mxu0 0.0
    %1607 = vmatprep.subr.mxu0 0.0
    %1608 = vmatpush2.msra.mxu0 0.0
    %1609 = vmatprep.subr.mxu0 0.0
    %1610 = vmatpush2.msra.mxu0 0.0
    %1611 = vmatprep.subr.mxu0 0.0
    %1612 = vmatpush2.msra.mxu0 0.0
    %1613 = vmatprep.subr.mxu0 0.0
    %1614 = vmatpush2.msra.mxu0 0.0
    %1615 = vmatprep.subr.mxu0 0.0
    %1616 = vmatpush2.msra.mxu0 0.0
    %1617 = vmatprep.subr.mxu0 0.0
    %1618 = vmatpush2.msra.mxu0 0.0
    %1619 = vmatprep.subr.mxu0 0.0
    %1620 = vmatpush2.msra.mxu0 0.0
    %1621 = vmatprep.subr.mxu0 0.0
    %1622 = vmatpush2.msra.mxu0 0.0
    %1623 = vmatprep.subr.mxu0 0.0
    %1624 = vmatpush2.msra.mxu0 0.0
    %1625 = vmatprep.subr.mxu0 0.0
    %1626 = vmatpush2.msra.mxu0 0.0
    %1627 = vmatprep.subr.mxu0 0.0
    %1628 = vmatpush2.msra.mxu0 0.0
    %1629 = vmatprep.subr.mxu0 0.0
    %1630 = vmatpush2.msra.mxu0 0.0
    %1631 = vmatprep.subr.mxu0 0.0
    %1632 = vmatpush2.msra.mxu0 0.0
    %1633 = vmatprep.subr.mxu0 0.0
    %1634 = vmatpush2.msra.mxu0 0.0
    %1635 = vmatprep.subr.mxu0 0.0
    %1636 = vmatpush2.msra.mxu0 0.0
    %1637 = vmatprep.mubr.f32.mxu0 0.0
    %1638 = vmatmul.mubr.f32.gmra.mxu0 %v1568
    %v1639 = vpop.f32.mrf.mxu0
    %v1640 = vadd.f32 %v1565, %v1639
    %v1641 = vpop.f32.mrf.mxu0
    %1642 = vmatprep.mubr.f32.mxu0 0.0
    %1643 = vmatmul.mubr.f32.gmra.mxu0 %v1571
    %v1644 = vpop.f32.mrf.mxu0
    %v1645 = vadd.f32 %v1565, %v1644
    %v1646 = vpop.f32.mrf.mxu0
    %1647 = vdwg.mxu0
    %v1648 = vld [vmem:[%s6] sm:$0xff]
    %v1649 = vld [vmem:[%s6 + $0x8] sm:$0xff]
    %v1650 = vld [vmem:[%s6 + $0x10] sm:$0xff]
    %v1651 = vld [vmem:[%s6 + $0x18] sm:$0xff]
    %v1652 = vld [vmem:[%s7] sm:$0x1]
    %v1654 = vlaneseq
    %v1655 = vshrl.u32 %v1654, 7
    %v1656 = vsub.s32 0, %v1655
    %v1657 = vrot.slane %v1652, %v1656
    %v1660 = vsel %vm86, %v1640, 0
    %v1663 = vsel %vm86, %v1645, 0
    %1665 = vmatprep.subr.mxu0 0.0
    %1666 = vmatpush1.msra.mxu0 0.0
    %1667 = vmatprep.subr.mxu0 0.0
    %1668 = vmatpush1.msra.mxu0 0.0
    %1669 = vmatprep.subr.mxu0 0.0
    %1670 = vmatpush1.msra.mxu0 0.0
    %1671 = vmatprep.subr.mxu0 0.0
    %1672 = vmatpush1.msra.mxu0 0.0
    %1673 = vmatprep.subr.mxu0 0.0
    %1674 = vmatpush1.msra.mxu0 0.0
    %1675 = vmatprep.subr.mxu0 0.0
    %1676 = vmatpush1.msra.mxu0 0.0
    %1677 = vmatprep.subr.mxu0 0.0
    %1678 = vmatpush1.msra.mxu0 0.0
    %1679 = vmatprep.subr.mxu0 0.0
    %1680 = vmatpush1.msra.mxu0 0.0
    %1681 = vmatprep.subr.mxu0 0.0
    %1682 = vmatpush1.msra.mxu0 0.0
    %1683 = vmatprep.subr.mxu0 0.0
    %1684 = vmatpush1.msra.mxu0 0.0
    %1685 = vmatprep.subr.mxu0 0.0
    %1686 = vmatpush1.msra.mxu0 0.0
    %1687 = vmatprep.subr.mxu0 0.0
    %1688 = vmatpush1.msra.mxu0 0.0
    %1689 = vmatprep.subr.mxu0 0.0
    %1690 = vmatpush1.msra.mxu0 %v1651
    %1691 = vmatprep.subr.mxu0 0.0
    %1692 = vmatpush1.msra.mxu0 %v1650
    %1693 = vmatprep.subr.mxu0 0.0
    %1694 = vmatpush1.msra.mxu0 %v1649
    %1695 = vmatprep.subr.mxu0 0.0
    %1696 = vmatpush1.msra.mxu0 %v1648
    %1697 = vmatprep.subr.mxu0 0.0
    %1698 = vmatpush2.msra.mxu0 0.0
    %1699 = vmatprep.subr.mxu0 0.0
    %1700 = vmatpush2.msra.mxu0 0.0
    %1701 = vmatprep.subr.mxu0 0.0
    %1702 = vmatpush2.msra.mxu0 0.0
    %1703 = vmatprep.subr.mxu0 0.0
    %1704 = vmatpush2.msra.mxu0 0.0
    %1705 = vmatprep.subr.mxu0 0.0
    %1706 = vmatpush2.msra.mxu0 0.0
    %1707 = vmatprep.subr.mxu0 0.0
    %1708 = vmatpush2.msra.mxu0 0.0
    %1709 = vmatprep.subr.mxu0 0.0
    %1710 = vmatpush2.msra.mxu0 0.0
    %1711 = vmatprep.subr.mxu0 0.0
    %1712 = vmatpush2.msra.mxu0 0.0
    %1713 = vmatprep.subr.mxu0 0.0
    %1714 = vmatpush2.msra.mxu0 0.0
    %1715 = vmatprep.subr.mxu0 0.0
    %1716 = vmatpush2.msra.mxu0 0.0
    %1717 = vmatprep.subr.mxu0 0.0
    %1718 = vmatpush2.msra.mxu0 0.0
    %1719 = vmatprep.subr.mxu0 0.0
    %1720 = vmatpush2.msra.mxu0 0.0
    %1721 = vmatprep.subr.mxu0 0.0
    %1722 = vmatpush2.msra.mxu0 0.0
    %1723 = vmatprep.subr.mxu0 0.0
    %1724 = vmatpush2.msra.mxu0 0.0
    %1725 = vmatprep.subr.mxu0 0.0
    %1726 = vmatpush2.msra.mxu0 0.0
    %1727 = vmatprep.subr.mxu0 0.0
    %1728 = vmatpush2.msra.mxu0 0.0
    %1729 = vmatprep.mubr.f32.mxu0 0.0
    %1730 = vmatmul.mubr.f32.gmra.mxu0 %v1660
    %v1731 = vpop.f32.mrf.mxu0
    %v1732 = vadd.f32 %v1657, %v1731
    %v1733 = vpop.f32.mrf.mxu0
    %1734 = vmatprep.mubr.f32.mxu0 0.0
    %1735 = vmatmul.mubr.f32.gmra.mxu0 %v1663
    %v1736 = vpop.f32.mrf.mxu0
    %v1737 = vadd.f32 %v1657, %v1736
    %v1738 = vpop.f32.mrf.mxu0
    %1739 = vdwg.mxu0
    %vm1740 = vcmask 523264
    %v1741 = vsel %vm1740, %v1732, 0.0
    %v1742 = vsel %vm1740, %v1737, 0.0
    %v1743 = vadd.f32 %v1741, %v1742
    %v1744 = vrot.slane %v1743, 4
    %v1745 = vadd.f32 %v1743, %v1744
    %v1746 = vrot.slane %v1745, 2
    %v1747 = vadd.f32 %v1745, %v1746
    %v1748 = vrot.slane %v1747, 1
    %v1749 = vadd.f32 %v1747, %v1748
    %v1750 = vmul.f32 %v1732, %v1732
    %v1751 = vmul.f32 %v1737, %v1737
    %v1752 = vsel %vm1740, %v1750, 0.0
    %v1753 = vsel %vm1740, %v1751, 0.0
    %v1754 = vadd.f32 %v1752, %v1753
    %v1755 = vrot.slane %v1754, 4
    %v1756 = vadd.f32 %v1754, %v1755
    %v1757 = vrot.slane %v1756, 2
    %v1758 = vadd.f32 %v1756, %v1757
    %v1759 = vrot.slane %v1758, 1
    %v1760 = vadd.f32 %v1758, %v1759
    %v1761 = vmul.f32 %v1749, 0.0625
    %v1762 = vmul.f32 %v1760, 0.0625
    %v1763 = vmul.f32 %v1761, %v1761
    %v1764 = vsub.f32 %v1762, %v1763
    %v1765 = vmax.f32 %v1764, 0.0
    %v1766 = vsub.f32 %v1732, %v1761
    %v1767 = vsub.f32 %v1737, %v1761
    %v1768 = vadd.f32 %v1765, 1e-05
    %v1769 = vrsqrt.pop %v1768
    %v1770 = vmul.f32 %v1766, %v1769
    %v1771 = vmul.f32 %v1767, %v1769
    %v1772 = vld [vmem:[%s8] sm:$0x1]
    %v1774 = vlaneseq
    %v1775 = vshrl.u32 %v1774, 7
    %v1776 = vsub.s32 0, %v1775
    %v1777 = vrot.slane %v1772, %v1776
    %v1779 = vmul.f32 %v1770, %v1777
    %v1780 = vmul.f32 %v1771, %v1777
    %v1781 = vld [vmem:[%s9] sm:$0x1]
    %v1783 = vlaneseq
    %v1784 = vshrl.u32 %v1783, 7
    %v1785 = vsub.s32 0, %v1784
    %v1786 = vrot.slane %v1781, %v1785
    %v1788 = vadd.f32 %v1779, %v1786
    %v1789 = vadd.f32 %v1780, %v1786
    %v1790 = vtanh.pop %v1788
    %v1791 = vtanh.pop %v1789
    %v1792 = vld [vmem:[%s10] sm:$0xff]
    %v1793 = vld [vmem:[%s10 + $0x8] sm:$0xff]
    %v1794 = vld [vmem:[%s10 + $0x10] sm:$0xff]
    %v1795 = vld [vmem:[%s10 + $0x18] sm:$0xff]
    %v1796 = vld [vmem:[%s10 + $0x20] sm:$0xff]
    %v1797 = vld [vmem:[%s10 + $0x28] sm:$0xff]
    %v1798 = vld [vmem:[%s10 + $0x30] sm:$0xff]
    %v1799 = vld [vmem:[%s10 + $0x38] sm:$0xff]
    %v1800 = vld [vmem:[%s11] sm:$0x1]
    %v1802 = vlaneseq
    %v1803 = vshrl.u32 %v1802, 7
    %v1804 = vsub.s32 0, %v1803
    %v1805 = vrot.slane %v1800, %v1804
    %v1808 = vsel %vm1740, %v1790, 0
    %v1811 = vsel %vm1740, %v1791, 0
    %1813 = vmatprep.subr.mxu0 0.0
    %1814 = vmatpush1.msra.mxu0 0.0
    %1815 = vmatprep.subr.mxu0 0.0
    %1816 = vmatpush1.msra.mxu0 0.0
    %1817 = vmatprep.subr.mxu0 0.0
    %1818 = vmatpush1.msra.mxu0 0.0
    %1819 = vmatprep.subr.mxu0 0.0
    %1820 = vmatpush1.msra.mxu0 0.0
    %1821 = vmatprep.subr.mxu0 0.0
    %1822 = vmatpush1.msra.mxu0 0.0
    %1823 = vmatprep.subr.mxu0 0.0
    %1824 = vmatpush1.msra.mxu0 0.0
    %1825 = vmatprep.subr.mxu0 0.0
    %1826 = vmatpush1.msra.mxu0 0.0
    %1827 = vmatprep.subr.mxu0 0.0
    %1828 = vmatpush1.msra.mxu0 0.0
    %1829 = vmatprep.subr.mxu0 0.0
    %1830 = vmatpush1.msra.mxu0 %v1799
    %1831 = vmatprep.subr.mxu0 0.0
    %1832 = vmatpush1.msra.mxu0 %v1798
    %1833 = vmatprep.subr.mxu0 0.0
    %1834 = vmatpush1.msra.mxu0 %v1797
    %1835 = vmatprep.subr.mxu0 0.0
    %1836 = vmatpush1.msra.mxu0 %v1796
    %1837 = vmatprep.subr.mxu0 0.0
    %1838 = vmatpush1.msra.mxu0 %v1795
    %1839 = vmatprep.subr.mxu0 0.0
    %1840 = vmatpush1.msra.mxu0 %v1794
    %1841 = vmatprep.subr.mxu0 0.0
    %1842 = vmatpush1.msra.mxu0 %v1793
    %1843 = vmatprep.subr.mxu0 0.0
    %1844 = vmatpush1.msra.mxu0 %v1792
    %1845 = vmatprep.subr.mxu0 0.0
    %1846 = vmatpush2.msra.mxu0 0.0
    %1847 = vmatprep.subr.mxu0 0.0
    %1848 = vmatpush2.msra.mxu0 0.0
    %1849 = vmatprep.subr.mxu0 0.0
    %1850 = vmatpush2.msra.mxu0 0.0
    %1851 = vmatprep.subr.mxu0 0.0
    %1852 = vmatpush2.msra.mxu0 0.0
    %1853 = vmatprep.subr.mxu0 0.0
    %1854 = vmatpush2.msra.mxu0 0.0
    %1855 = vmatprep.subr.mxu0 0.0
    %1856 = vmatpush2.msra.mxu0 0.0
    %1857 = vmatprep.subr.mxu0 0.0
    %1858 = vmatpush2.msra.mxu0 0.0
    %1859 = vmatprep.subr.mxu0 0.0
    %1860 = vmatpush2.msra.mxu0 0.0
    %1861 = vmatprep.subr.mxu0 0.0
    %1862 = vmatpush2.msra.mxu0 0.0
    %1863 = vmatprep.subr.mxu0 0.0
    %1864 = vmatpush2.msra.mxu0 0.0
    %1865 = vmatprep.subr.mxu0 0.0
    %1866 = vmatpush2.msra.mxu0 0.0
    %1867 = vmatprep.subr.mxu0 0.0
    %1868 = vmatpush2.msra.mxu0 0.0
    %1869 = vmatprep.subr.mxu0 0.0
    %1870 = vmatpush2.msra.mxu0 0.0
    %1871 = vmatprep.subr.mxu0 0.0
    %1872 = vmatpush2.msra.mxu0 0.0
    %1873 = vmatprep.subr.mxu0 0.0
    %1874 = vmatpush2.msra.mxu0 0.0
    %1875 = vmatprep.subr.mxu0 0.0
    %1876 = vmatpush2.msra.mxu0 0.0
    %1877 = vmatprep.mubr.f32.mxu0 0.0
    %1878 = vmatmul.mubr.f32.gmra.mxu0 %v1808
    %v1879 = vpop.f32.mrf.mxu0
    %v1880 = vadd.f32 %v1805, %v1879
    %v1881 = vpop.f32.mrf.mxu0
    %1882 = vmatprep.mubr.f32.mxu0 0.0
    %1883 = vmatmul.mubr.f32.gmra.mxu0 %v1811
    %v1884 = vpop.f32.mrf.mxu0
    %v1885 = vadd.f32 %v1805, %v1884
    %v1886 = vpop.f32.mrf.mxu0
    %1887 = vdwg.mxu0
    %v1888 = vadd.f32 %v1640, %v1880
    %v1889 = vadd.f32 %v1645, %v1885
    %1890 = vst.msk [vmem:[#allocation8] sm:$0xff] %vm86, %v1888
    %1891 = vst.msk [vmem:[#allocation8 + $0x8] sm:$0xff] %vm86, %v1889
    // Predicated region
    $region58: #{tpu_custom_call.1} parent=1 // pred_check
      _
    $region59: #{tpu_custom_call.1} parent=1 // pred_check_branch
      %1893 = sbr.rel (0) target = $region61
    $region60: #{tpu_custom_call.1} parent=1 // pred_region
      %s1895 = ssub.s32 256, 256
      %1896 = vsyncadd [#allocation5], %s1895
      %s1897 = sshll.u32 [#allocation8], 4
      %s1898 = int_to_ptr.vmem [resolvable:$true] %s1897
      %1903 = dma.vmem_to_hbm [thread:$0]  %s1898, 256, %s12, [#allocation5], 128, 128, 8
    $region61: #{tpu_custom_call.1} parent=1 // pred_fallthru
      _
    // Predicated region
    $region62: #{tpu_custom_call.1} parent=1 // pred_check
      _
    $region63: #{tpu_custom_call.1} parent=1 // pred_check_branch
      %1905 = sbr.rel (0) target = $region65
    $region64: #{tpu_custom_call.1} parent=1 // pred_region
      %s1907 = ssub.s32 1024, 1024
      %1908 = vsyncadd [#allocation10], %s1907
      %s1909 = sshll.u32 [#allocation9], 4
      %s1910 = int_to_ptr.vmem [resolvable:$true] %s1909
      %1915 = dma.vmem_to_hbm [thread:$0]  %s1910, 1024, %s13, [#allocation10], 128, 128, 8
    $region65: #{tpu_custom_call.1} parent=1 // pred_fallthru
      _
    // Predicated region
    $region66: #{tpu_custom_call.1} parent=1 // pred_check
      _
    $region67: #{tpu_custom_call.1} parent=1 // pred_check_branch
      %1917 = sbr.rel (0) target = $region69
    $region68: #{tpu_custom_call.1} parent=1 // pred_region
      %1918 = dma.done [#allocation5], 256
    $region69: #{tpu_custom_call.1} parent=1 // pred_fallthru
      _
    // Predicated region
    $region70: #{tpu_custom_call.1} parent=1 // pred_check
      _
    $region71: #{tpu_custom_call.1} parent=1 // pred_check_branch
      %1920 = sbr.rel (0) target = $region73
    $region72: #{tpu_custom_call.1} parent=1 // pred_region
      %1921 = dma.done [#allocation10], 1024
    $region73: #{tpu_custom_call.1} parent=1 // pred_fallthru
      _
    %1922 = vsyncpa [#allocation4], 1
    %1923 = vsyncpa [#allocation7], 1
    %1924 = vsyncpa [#allocation5], 1
    %1925 = vsyncpa [#allocation10], 1

</llo_original>
